<compile_context>
chip_gen: v6e
topology: v6e:2x2x1
jax: 0.10.0
libtpu: 0.0.40
codegen_flags: <defaults>
</compile_context>

<pallas_src>
import math

import numpy as np

import jax
import jax.numpy as jnp
from jax.experimental import pallas as pl
from jax.experimental.pallas import tpu as pltpu


def _round_up(x, m):
    return (x + m - 1) // m * m


def gaussian_1d_taps(sigmalist, kernel_size):
    """Per-sigma normalized 1-D Gaussian taps (frozen weights -> numpy constants).

    Matches the torch construction: gauss[x] = exp(-(x-mu)^2 / (2 sigma^2)),
    normalized to sum 1; the 2-D window is outer(gauss, gauss).
    """
    mu = kernel_size // 2
    rows = []
    for sigma in sigmalist:
        g = np.array(
            [math.exp(-((x - mu) ** 2) / float(2.0 * sigma ** 2))
             for x in range(kernel_size)],
            dtype=np.float64,
        )
        g = g / g.sum()
        rows.append(g.astype(np.float32))
    return np.stack(rows, axis=0)  # (S, K) float32


def _banded_matrices(taps, out_len, out_len_pad, in_len):
    """mats[s, r, r:r+K] = taps[s]; rows in [out_len, out_len_pad) stay zero."""
    S, K = taps.shape
    assert out_len + K - 1 == in_len
    mats = np.zeros((S, out_len_pad, in_len), dtype=np.float32)
    for s in range(S):
        for r in range(out_len):
            mats[s, r, r:r + K] = taps[s]
    return mats


def _choose_block_b(nc, bytes_per_image, vmem_budget_bytes=8 << 20):
    """Largest divisor B of nc keeping >=2 grid steps (when possible) and the
    double-buffered block footprint under a conservative VMEM budget."""
    best = 1
    for b in range(1, nc + 1):
        if nc % b:
            continue
        if nc // b < 2 and nc > 1:          # keep both v7x TensorCores busy
            continue
        if 2 * b * bytes_per_image > vmem_budget_bytes:
            continue
        best = b
    return best


def _gaussian_mxu_kernel(x_ref, v_ref, h_ref, o_ref):
    """Separable Gaussian blur (all S sigmas) of a block of B images on the MXU.

    x_ref: (B, H, W)                  VMEM   image block
    v_ref: (S, B, H_out, H)           VMEM   vertical banded taps (B-broadcast)
    h_ref: (S, B, W_out_pad, W)       VMEM   horizontal banded taps (B-broadcast)
    o_ref: (B, S, H_out, W_out_pad)   VMEM   lane-dense (W_out_pad % 128 == 0)
    """
    x = x_ref[...]                                   # (B, H, W) float32
    num_sigmas = v_ref.shape[0]
    batch = x_ref.shape[0]

    for s in range(num_sigmas):                      # S is small; unrolls at trace time
        v = v_ref[s]                                 # (B, H_out, H)
        h = h_ref[s]                                 # (B, W_out_pad, W)
        # Vertical 1-D pass: contract over H (batched MXU matmul, f32 acc).
        t = jnp.einsum("boh,bhw->bow", v, x,
                       preferred_element_type=jnp.float32)
        # Horizontal 1-D pass: contract over W (batched MXU matmul); the
        # W_out_pad free dim makes the result (and its store) lane-dense.
        out_s = jnp.einsum("bow,bvw->bov", t, h,
                           preferred_element_type=jnp.float32)
        for b in range(batch):                       # static, full-lane stores
            o_ref[b, s, :, :] = out_s[b].astype(o_ref.dtype)


def gaussian_forward(x, sigmalist, kernel_size, *, stride=1, padding=0):
    """Forward pass of the Gaussian module. x: (N, C_in, H, W) float32."""
    # TODO(synk): general stride/padding (the module defaults are 1 / 0).
    assert stride == 1 and padding == 0, "only the module defaults are implemented"
    N, C_in, H, W = x.shape
    S = len(sigmalist)
    K = kernel_size
    H_out, W_out = H - K + 1, W - K + 1
    assert H_out > 0 and W_out > 0
    W_out_pad = _round_up(W_out, 128)                 # lane-dense output stores

    taps = gaussian_1d_taps(sigmalist, K)                     # (S, K) frozen weights
    v_mats = _banded_matrices(taps, H_out, H_out, H)          # (S, H_out, H)
    h_mats = _banded_matrices(taps, W_out, W_out_pad, W)      # (S, W_out_pad, W)

    NC = N * C_in
    x_flat = x.reshape(NC, H, W)

    bytes_per_image = 4 * (H * W + S * H_out * W_out_pad)
    B = _choose_block_b(NC, bytes_per_image)
    grid = (NC // B,)

    # Broadcast the tap matrices over the image-block axis so both MXU passes
    # are canonical batched matmuls (small; DMA'd into VMEM once and reused).
    v_in = jnp.asarray(np.ascontiguousarray(
        np.broadcast_to(v_mats[:, None], (S, B, H_out, H))))
    h_in = jnp.asarray(np.ascontiguousarray(
        np.broadcast_to(h_mats[:, None], (S, B, W_out_pad, W))))

    out = pl.pallas_call(
        _gaussian_mxu_kernel,
        out_shape=jax.ShapeDtypeStruct((NC, S, H_out, W_out_pad), x.dtype),
        grid_spec=pltpu.PrefetchScalarGridSpec(
            num_scalar_prefetch=0,
            grid=grid,
            in_specs=[
                pl.BlockSpec((B, H, W), lambda i: (i, 0, 0)),
                # constant block index -> fetched once, stays resident in VMEM
                pl.BlockSpec((S, B, H_out, H), lambda i: (0, 0, 0, 0)),
                pl.BlockSpec((S, B, W_out_pad, W), lambda i: (0, 0, 0, 0)),
            ],
            out_specs=pl.BlockSpec((B, S, H_out, W_out_pad),
                                   lambda i: (i, 0, 0, 0)),
        ),
        compiler_params=pltpu.CompilerParams(
            dimension_semantics=("parallel",),
            vmem_limit_bytes=32 * 1024 * 1024,
        ),
    )(x_flat, v_in, h_in)

    # Drop lane padding; (N*C_in, S, ...) -> (N, C_in*S, ...): row-major reshape
    # gives channel index c*S + s, matching the torch permute+reshape ordering
    # (the torch module only supports C_in == 1 anyway).
    out = out[:, :, :, :W_out]
    return out.reshape(N, C_in * S, H_out, W_out)


def _reference_conv(x, sigmalist, kernel_size):
    """Pure-JAX reference: grouped conv, each in-channel with every sigma window."""
    N, C_in, H, W = x.shape
    S = len(sigmalist)
    taps = jnp.asarray(gaussian_1d_taps(sigmalist, kernel_size))          # (S, K)
    win2d = jnp.einsum("si,sj->sij", taps, taps)                          # (S, K, K)
    w_full = jnp.tile(win2d[None], (C_in, 1, 1, 1)).reshape(
        C_in * S, 1, kernel_size, kernel_size)
    return jax.lax.conv_general_dilated(
        x, w_full,
        window_strides=(1, 1),
        padding="VALID",
        dimension_numbers=("NCHW", "OIHW", "NCHW"),
        feature_group_count=C_in,
        precision=jax.lax.Precision.HIGHEST)


if __name__ == "__main__":
    key = jax.random.PRNGKey(0)

    # Small shapes consistent with the module (in_channels=1, as the torch
    # reshape requires; kernel_size shrunk from 64 to 8 for the demo).
    N, C_in, H, W = 4, 1, 32, 32
    sigmalist = [1.0, 2.0, 4.0]
    kernel_size = 8

    x = jax.random.uniform(key, (N, C_in, H, W), dtype=jnp.float32)

    out = gaussian_forward(x, sigmalist, kernel_size)
    out = jax.block_until_ready(out)

    ref = _reference_conv(x, sigmalist, kernel_size)
    assert out.shape == (N, C_in * len(sigmalist),
                         H - kernel_size + 1, W - kernel_size + 1)
    # f32 MXU matmuls (multi-pass) vs f32 conv reference: tight but not bitwise.
    assert jnp.allclose(out, ref, atol=1e-4, rtol=1e-4)

    print("KERNEL_OK")
</pallas_src>

<mosaic_0001>
module attributes {stable_mosaic.version = 11 : i64} {
  func.func @_gaussian_mxu_kernel(%arg0: i32, %arg1: memref<2x32x32xf32, #tpu.memory_space<vmem>>, %arg2: memref<3x2x25x32xf32, #tpu.memory_space<vmem>>, %arg3: memref<3x2x128x32xf32, #tpu.memory_space<vmem>>, %arg4: memref<2x3x25x128xf32, #tpu.memory_space<vmem>>) attributes {dimension_semantics = [#tpu.dimension_semantics<parallel>], iteration_bounds = array<i64: 2>, scalar_prefetch = 0 : i64, scratch_operands = 0 : i64, tpu.core_type = #tpu.core_type<tc>, window_params = [{transform_indices = @transform_0, window_bounds = array<i64: 2, 32, 32>}, {pipeline_mode = #tpu.pipeline_mode<synchronous>, transform_indices = @transform_1, window_bounds = array<i64: 3, 2, 25, 32>}, {pipeline_mode = #tpu.pipeline_mode<synchronous>, transform_indices = @transform_2, window_bounds = array<i64: 3, 2, 128, 32>}, {transform_indices = @transform_3, window_bounds = array<i64: 2, 3, 25, 128>}]} {
    %c0 = arith.constant 0 : index
    %c0_0 = arith.constant 0 : index
    %c0_1 = arith.constant 0 : index
    %0 = vector.load %arg1[%c0, %c0_0, %c0_1] : memref<2x32x32xf32, #tpu.memory_space<vmem>>, vector<2x32x32xf32>
    %c0_2 = arith.constant 0 : index
    %c0_3 = arith.constant 0 : index
    %c0_4 = arith.constant 0 : index
    %c0_5 = arith.constant 0 : index
    %1 = vector.load %arg2[%c0_2, %c0_3, %c0_4, %c0_5] : memref<3x2x25x32xf32, #tpu.memory_space<vmem>>, vector<1x2x25x32xf32>
    %2 = vector.shape_cast %1 : vector<1x2x25x32xf32> to vector<2x25x32xf32>
    %c0_6 = arith.constant 0 : index
    %c0_7 = arith.constant 0 : index
    %c0_8 = arith.constant 0 : index
    %c0_9 = arith.constant 0 : index
    %3 = vector.load %arg3[%c0_6, %c0_7, %c0_8, %c0_9] : memref<3x2x128x32xf32, #tpu.memory_space<vmem>>, vector<1x2x128x32xf32>
    %4 = vector.shape_cast %3 : vector<1x2x128x32xf32> to vector<2x128x32xf32>
    "tpu.trace_start"() <{level = 10 : i32, message = "boh,bhw->bow"}> : () -> ()
    %cst = arith.constant dense<0.000000e+00> : vector<2x25x32xf32>
    %5 = tpu.matmul %2, %0, %cst {dimension_numbers = #tpu.dot_dimension_numbers<[2], [1], [1], [2], [0, 0, 0, 1, 1, 2], [0], [0]>} : vector<2x25x32xf32>, vector<2x32x32xf32>, vector<2x25x32xf32> -> vector<2x25x32xf32>
    "tpu.trace_stop"() : () -> ()
    "tpu.trace_start"() <{level = 10 : i32, message = "bow,bvw->bov"}> : () -> ()
    %cst_10 = arith.constant dense<0.000000e+00> : vector<2x25x128xf32>
    %6 = tpu.matmul %5, %4, %cst_10 {dimension_numbers = #tpu.dot_dimension_numbers<[2], [2], [1], [1], [0, 0, 0, 1, 1, 1], [0], [0]>} : vector<2x25x32xf32>, vector<2x128x32xf32>, vector<2x25x128xf32> -> vector<2x25x128xf32>
    "tpu.trace_stop"() : () -> ()
    %7 = vector.extract_strided_slice %6 {offsets = [0, 0, 0], sizes = [1, 25, 128], strides = [1, 1, 1]} : vector<2x25x128xf32> to vector<1x25x128xf32>
    %8 = vector.shape_cast %7 : vector<1x25x128xf32> to vector<25x128xf32>
    %c0_11 = arith.constant 0 : index
    %c0_12 = arith.constant 0 : index
    %c0_13 = arith.constant 0 : index
    %c0_14 = arith.constant 0 : index
    %9 = vector.load %arg4[%c0_11, %c0_12, %c0_13, %c0_14] : memref<2x3x25x128xf32, #tpu.memory_space<vmem>>, vector<1x1x25x128xf32>
    %10 = vector.shape_cast %9 : vector<1x1x25x128xf32> to vector<25x128xf32>
    %11 = vector.shape_cast %8 : vector<25x128xf32> to vector<1x1x25x128xf32>
    tpu.vector_store %arg4[%c0_11, %c0_12, %c0_13, %c0_14], %11 {strides = array<i32>} : memref<2x3x25x128xf32, #tpu.memory_space<vmem>>, vector<1x1x25x128xf32>,
    %12 = vector.extract_strided_slice %6 {offsets = [1, 0, 0], sizes = [1, 25, 128], strides = [1, 1, 1]} : vector<2x25x128xf32> to vector<1x25x128xf32>
    %13 = vector.shape_cast %12 : vector<1x25x128xf32> to vector<25x128xf32>
    %c1 = arith.constant 1 : index
    %c0_15 = arith.constant 0 : index
    %c0_16 = arith.constant 0 : index
    %c0_17 = arith.constant 0 : index
    %14 = vector.load %arg4[%c1, %c0_15, %c0_16, %c0_17] : memref<2x3x25x128xf32, #tpu.memory_space<vmem>>, vector<1x1x25x128xf32>
    %15 = vector.shape_cast %14 : vector<1x1x25x128xf32> to vector<25x128xf32>
    %16 = vector.shape_cast %13 : vector<25x128xf32> to vector<1x1x25x128xf32>
    tpu.vector_store %arg4[%c1, %c0_15, %c0_16, %c0_17], %16 {strides = array<i32>} : memref<2x3x25x128xf32, #tpu.memory_space<vmem>>, vector<1x1x25x128xf32>,
    %c1_18 = arith.constant 1 : index
    %c0_19 = arith.constant 0 : index
    %c0_20 = arith.constant 0 : index
    %c0_21 = arith.constant 0 : index
    %17 = vector.load %arg2[%c1_18, %c0_19, %c0_20, %c0_21] : memref<3x2x25x32xf32, #tpu.memory_space<vmem>>, vector<1x2x25x32xf32>
    %18 = vector.shape_cast %17 : vector<1x2x25x32xf32> to vector<2x25x32xf32>
    %c1_22 = arith.constant 1 : index
    %c0_23 = arith.constant 0 : index
    %c0_24 = arith.constant 0 : index
    %c0_25 = arith.constant 0 : index
    %19 = vector.load %arg3[%c1_22, %c0_23, %c0_24, %c0_25] : memref<3x2x128x32xf32, #tpu.memory_space<vmem>>, vector<1x2x128x32xf32>
    %20 = vector.shape_cast %19 : vector<1x2x128x32xf32> to vector<2x128x32xf32>
    "tpu.trace_start"() <{level = 10 : i32, message = "boh,bhw->bow"}> : () -> ()
    %cst_26 = arith.constant dense<0.000000e+00> : vector<2x25x32xf32>
    %21 = tpu.matmul %18, %0, %cst_26 {dimension_numbers = #tpu.dot_dimension_numbers<[2], [1], [1], [2], [0, 0, 0, 1, 1, 2], [0], [0]>} : vector<2x25x32xf32>, vector<2x32x32xf32>, vector<2x25x32xf32> -> vector<2x25x32xf32>
    "tpu.trace_stop"() : () -> ()
    "tpu.trace_start"() <{level = 10 : i32, message = "bow,bvw->bov"}> : () -> ()
    %cst_27 = arith.constant dense<0.000000e+00> : vector<2x25x128xf32>
    %22 = tpu.matmul %21, %20, %cst_27 {dimension_numbers = #tpu.dot_dimension_numbers<[2], [2], [1], [1], [0, 0, 0, 1, 1, 1], [0], [0]>} : vector<2x25x32xf32>, vector<2x128x32xf32>, vector<2x25x128xf32> -> vector<2x25x128xf32>
    "tpu.trace_stop"() : () -> ()
    %23 = vector.extract_strided_slice %22 {offsets = [0, 0, 0], sizes = [1, 25, 128], strides = [1, 1, 1]} : vector<2x25x128xf32> to vector<1x25x128xf32>
    %24 = vector.shape_cast %23 : vector<1x25x128xf32> to vector<25x128xf32>
    %c0_28 = arith.constant 0 : index
    %c1_29 = arith.constant 1 : index
    %c0_30 = arith.constant 0 : index
    %c0_31 = arith.constant 0 : index
    %25 = vector.load %arg4[%c0_28, %c1_29, %c0_30, %c0_31] : memref<2x3x25x128xf32, #tpu.memory_space<vmem>>, vector<1x1x25x128xf32>
    %26 = vector.shape_cast %25 : vector<1x1x25x128xf32> to vector<25x128xf32>
    %27 = vector.shape_cast %24 : vector<25x128xf32> to vector<1x1x25x128xf32>
    tpu.vector_store %arg4[%c0_28, %c1_29, %c0_30, %c0_31], %27 {strides = array<i32>} : memref<2x3x25x128xf32, #tpu.memory_space<vmem>>, vector<1x1x25x128xf32>,
    %28 = vector.extract_strided_slice %22 {offsets = [1, 0, 0], sizes = [1, 25, 128], strides = [1, 1, 1]} : vector<2x25x128xf32> to vector<1x25x128xf32>
    %29 = vector.shape_cast %28 : vector<1x25x128xf32> to vector<25x128xf32>
    %c1_32 = arith.constant 1 : index
    %c1_33 = arith.constant 1 : index
    %c0_34 = arith.constant 0 : index
    %c0_35 = arith.constant 0 : index
    %30 = vector.load %arg4[%c1_32, %c1_33, %c0_34, %c0_35] : memref<2x3x25x128xf32, #tpu.memory_space<vmem>>, vector<1x1x25x128xf32>
    %31 = vector.shape_cast %30 : vector<1x1x25x128xf32> to vector<25x128xf32>
    %32 = vector.shape_cast %29 : vector<25x128xf32> to vector<1x1x25x128xf32>
    tpu.vector_store %arg4[%c1_32, %c1_33, %c0_34, %c0_35], %32 {strides = array<i32>} : memref<2x3x25x128xf32, #tpu.memory_space<vmem>>, vector<1x1x25x128xf32>,
    %c2 = arith.constant 2 : index
    %c0_36 = arith.constant 0 : index
    %c0_37 = arith.constant 0 : index
    %c0_38 = arith.constant 0 : index
    %33 = vector.load %arg2[%c2, %c0_36, %c0_37, %c0_38] : memref<3x2x25x32xf32, #tpu.memory_space<vmem>>, vector<1x2x25x32xf32>
    %34 = vector.shape_cast %33 : vector<1x2x25x32xf32> to vector<2x25x32xf32>
    %c2_39 = arith.constant 2 : index
    %c0_40 = arith.constant 0 : index
    %c0_41 = arith.constant 0 : index
    %c0_42 = arith.constant 0 : index
    %35 = vector.load %arg3[%c2_39, %c0_40, %c0_41, %c0_42] : memref<3x2x128x32xf32, #tpu.memory_space<vmem>>, vector<1x2x128x32xf32>
    %36 = vector.shape_cast %35 : vector<1x2x128x32xf32> to vector<2x128x32xf32>
    "tpu.trace_start"() <{level = 10 : i32, message = "boh,bhw->bow"}> : () -> ()
    %cst_43 = arith.constant dense<0.000000e+00> : vector<2x25x32xf32>
    %37 = tpu.matmul %34, %0, %cst_43 {dimension_numbers = #tpu.dot_dimension_numbers<[2], [1], [1], [2], [0, 0, 0, 1, 1, 2], [0], [0]>} : vector<2x25x32xf32>, vector<2x32x32xf32>, vector<2x25x32xf32> -> vector<2x25x32xf32>
    "tpu.trace_stop"() : () -> ()
    "tpu.trace_start"() <{level = 10 : i32, message = "bow,bvw->bov"}> : () -> ()
    %cst_44 = arith.constant dense<0.000000e+00> : vector<2x25x128xf32>
    %38 = tpu.matmul %37, %36, %cst_44 {dimension_numbers = #tpu.dot_dimension_numbers<[2], [2], [1], [1], [0, 0, 0, 1, 1, 1], [0], [0]>} : vector<2x25x32xf32>, vector<2x128x32xf32>, vector<2x25x128xf32> -> vector<2x25x128xf32>
    "tpu.trace_stop"() : () -> ()
    %39 = vector.extract_strided_slice %38 {offsets = [0, 0, 0], sizes = [1, 25, 128], strides = [1, 1, 1]} : vector<2x25x128xf32> to vector<1x25x128xf32>
    %40 = vector.shape_cast %39 : vector<1x25x128xf32> to vector<25x128xf32>
    %c0_45 = arith.constant 0 : index
    %c2_46 = arith.constant 2 : index
    %c0_47 = arith.constant 0 : index
    %c0_48 = arith.constant 0 : index
    %41 = vector.load %arg4[%c0_45, %c2_46, %c0_47, %c0_48] : memref<2x3x25x128xf32, #tpu.memory_space<vmem>>, vector<1x1x25x128xf32>
    %42 = vector.shape_cast %41 : vector<1x1x25x128xf32> to vector<25x128xf32>
    %43 = vector.shape_cast %40 : vector<25x128xf32> to vector<1x1x25x128xf32>
    tpu.vector_store %arg4[%c0_45, %c2_46, %c0_47, %c0_48], %43 {strides = array<i32>} : memref<2x3x25x128xf32, #tpu.memory_space<vmem>>, vector<1x1x25x128xf32>,
    %44 = vector.extract_strided_slice %38 {offsets = [1, 0, 0], sizes = [1, 25, 128], strides = [1, 1, 1]} : vector<2x25x128xf32> to vector<1x25x128xf32>
    %45 = vector.shape_cast %44 : vector<1x25x128xf32> to vector<25x128xf32>
    %c1_49 = arith.constant 1 : index
    %c2_50 = arith.constant 2 : index
    %c0_51 = arith.constant 0 : index
    %c0_52 = arith.constant 0 : index
    %46 = vector.load %arg4[%c1_49, %c2_50, %c0_51, %c0_52] : memref<2x3x25x128xf32, #tpu.memory_space<vmem>>, vector<1x1x25x128xf32>
    %47 = vector.shape_cast %46 : vector<1x1x25x128xf32> to vector<25x128xf32>
    %48 = vector.shape_cast %45 : vector<25x128xf32> to vector<1x1x25x128xf32>
    tpu.vector_store %arg4[%c1_49, %c2_50, %c0_51, %c0_52], %48 {strides = array<i32>} : memref<2x3x25x128xf32, #tpu.memory_space<vmem>>, vector<1x1x25x128xf32>,
    return
  }
  func.func @transform_0(%arg0: i32) -> (i32, i32, i32) {
    %c0_i32 = arith.constant 0 : i32
    %c0_i32_0 = arith.constant 0 : i32
    %c0_i32_1 = arith.constant 0 : i32
    return %arg0, %c0_i32, %c0_i32_0 : i32, i32, i32
  }
  func.func @transform_1(%arg0: i32) -> (i32, i32, i32, i32) {
    %c0_i32 = arith.constant 0 : i32
    %c0_i32_0 = arith.constant 0 : i32
    %c0_i32_1 = arith.constant 0 : i32
    %c0_i32_2 = arith.constant 0 : i32
    %c0_i32_3 = arith.constant 0 : i32
    return %c0_i32, %c0_i32_0, %c0_i32_1, %c0_i32_2 : i32, i32, i32, i32
  }
  func.func @transform_2(%arg0: i32) -> (i32, i32, i32, i32) {
    %c0_i32 = arith.constant 0 : i32
    %c0_i32_0 = arith.constant 0 : i32
    %c0_i32_1 = arith.constant 0 : i32
    %c0_i32_2 = arith.constant 0 : i32
    %c0_i32_3 = arith.constant 0 : i32
    return %c0_i32, %c0_i32_0, %c0_i32_1, %c0_i32_2 : i32, i32, i32, i32
  }
  func.func @transform_3(%arg0: i32) -> (i32, i32, i32, i32) {
    %c0_i32 = arith.constant 0 : i32
    %c0_i32_0 = arith.constant 0 : i32
    %c0_i32_1 = arith.constant 0 : i32
    %c0_i32_2 = arith.constant 0 : i32
    return %arg0, %c0_i32, %c0_i32_0, %c0_i32_1 : i32, i32, i32, i32
  }
}

</mosaic_0001>

<llo_original>
// kernel: tpu_custom_call.1
$region0: #{tpu_custom_call.1}
  #allocation0 [shape = 'u32[]', space=smem, size = 0x4, offset = 0x4, fixed_abs, tag = 'smem constant byte address 0x4 - core index']
  #allocation1 [shape = 'u32[144,128]{1,0:T(1,128)}', space=vmem, size = 0x12000, scoped, tag = 'internal scratch']
  %s0 = inlined_call_operand.vmem [shape: f32[4,32,32], index: 0, kind: input, shape index: {}]
  %s1 = inlined_call_operand.vmem [shape: f32[3,2,25,32], index: 1, kind: input, shape index: {}]
  %s2 = inlined_call_operand.vmem [shape: f32[3,2,128,32], index: 2, kind: input, shape index: {}]
  %s3 = inlined_call_operand.vmem [shape: f32[4,3,25,128], index: 3, kind: output, shape index: {}]
  %s4 = sld [smem:[#allocation0]]
  $region45: #{tpu_custom_call.1} parent=0
    _
  %s6 = ssub.s32 1, %s4
  %s7 = scalar_select 0, %s6, %s4
  loop: start=0, step=1, limit=4
  $region2: #{tpu_custom_call.1} parent=0 // loop_pre_header
    _
  $region3: #{tpu_custom_call.1} parent=0 // loop_header
    %s9 = sphi 0, %s13
    %p10 = scmp.ge.s32.totalorder %s9, 4
    %s19 = sphi 0, %s21
    %s22 = sphi 0, %s19
    %s23 = sphi 0, %s22
    %s39 = sphi 0, %s23
    %s43 = sphi 0, %s43
    %s45 = sphi 0, %s43
    %s46 = sphi 0, %s45
    %s60 = sphi 0, %s46
    %s64 = sphi 0, %s64
    %s66 = sphi 0, %s64
    %s67 = sphi 0, %s66
    %s81 = sphi 0, %s67
    %s87 = sphi 0, %s89
    %s90 = sphi 0, %s87
    %s91 = sphi 0, %s90
    %s107 = sphi 0, %s91
  $region4: #{tpu_custom_call.1} parent=0 // loop_header_branch
    %12 = sbr.rel (%p10) target = $region8
  $region5: #{tpu_custom_call.1} parent=0 // loop_body
    %s14 = ssub.s32 %s9, 1
    %s15 = ssub.s32 %s9, 2
    %s16 = sadd.s32 %s9, 1
    %s17 = ssub.s32 %s9, %s16
    %p18 = scmp.eq.s32.totalorder %s17, 0
    %s20 = sadd.s32 %s19, 1
    %s21 = scalar_select %p18, %s19, %s20
    %p24 = pneg %p18
    %p25 = scmp.eq.s32.totalorder %s9, 1
    %p26 = por %p24, %p25
    %p27 = scmp.ne.s32.totalorder %s19, %s22
    %p28 = scmp.eq.s32.totalorder %s9, 0
    %p29 = por %p27, %p28
    %p30 = scmp.ne.s32.totalorder %s19, %s22
    %p31 = scmp.eq.s32.totalorder %s14, 1
    %p32 = por %p30, %p31
    %p33 = scmp.ne.s32.totalorder %s22, %s23
    %p34 = scmp.eq.s32.totalorder %s14, 0
    %p35 = por %p33, %p34
    %p36 = scmp.ne.s32.totalorder %s22, %s23
    %p37 = scmp.eq.s32.totalorder %s15, 1
    %p38 = por %p36, %p37
    %p40 = scmp.ne.s32.totalorder %s23, %s39
    %p41 = scmp.eq.s32.totalorder %s15, 0
    %p42 = por %p40, %p41
    %s44 = sadd.s32 %s43, 1
    %p47 = scmp.eq.s32.totalorder %s9, 1
    %p48 = scmp.ne.s32.totalorder %s43, %s45
    %p49 = scmp.eq.s32.totalorder %s9, 0
    %p50 = por %p48, %p49
    %p51 = scmp.ne.s32.totalorder %s43, %s45
    %p52 = scmp.eq.s32.totalorder %s14, 1
    %p53 = por %p51, %p52
    %p54 = scmp.ne.s32.totalorder %s45, %s46
    %p55 = scmp.eq.s32.totalorder %s14, 0
    %p56 = por %p54, %p55
    %p57 = scmp.ne.s32.totalorder %s45, %s46
    %p58 = scmp.eq.s32.totalorder %s15, 1
    %p59 = por %p57, %p58
    %p61 = scmp.ne.s32.totalorder %s46, %s60
    %p62 = scmp.eq.s32.totalorder %s15, 0
    %p63 = por %p61, %p62
    %s65 = sadd.s32 %s64, 1
    %p68 = scmp.eq.s32.totalorder %s9, 1
    %p69 = scmp.ne.s32.totalorder %s64, %s66
    %p70 = scmp.eq.s32.totalorder %s9, 0
    %p71 = por %p69, %p70
    %p72 = scmp.ne.s32.totalorder %s64, %s66
    %p73 = scmp.eq.s32.totalorder %s14, 1
    %p74 = por %p72, %p73
    %p75 = scmp.ne.s32.totalorder %s66, %s67
    %p76 = scmp.eq.s32.totalorder %s14, 0
    %p77 = por %p75, %p76
    %p78 = scmp.ne.s32.totalorder %s66, %s67
    %p79 = scmp.eq.s32.totalorder %s15, 1
    %p80 = por %p78, %p79
    %p82 = scmp.ne.s32.totalorder %s67, %s81
    %p83 = scmp.eq.s32.totalorder %s15, 0
    %p84 = por %p82, %p83
    %s85 = ssub.s32 %s9, %s16
    %p86 = scmp.eq.s32.totalorder %s85, 0
    %s88 = sadd.s32 %s87, 1
    %s89 = scalar_select %p86, %s87, %s88
    %p92 = pneg %p86
    %p93 = scmp.eq.s32.totalorder %s9, 1
    %p94 = por %p92, %p93
    %p95 = scmp.ne.s32.totalorder %s87, %s90
    %p96 = scmp.eq.s32.totalorder %s9, 0
    %p97 = por %p95, %p96
    %p98 = scmp.ne.s32.totalorder %s87, %s90
    %p99 = scmp.eq.s32.totalorder %s14, 1
    %p100 = por %p98, %p99
    %p101 = scmp.ne.s32.totalorder %s90, %s91
    %p102 = scmp.eq.s32.totalorder %s14, 0
    %p103 = por %p101, %p102
    %p104 = scmp.ne.s32.totalorder %s90, %s91
    %p105 = scmp.eq.s32.totalorder %s15, 1
    %p106 = por %p104, %p105
    %p108 = scmp.ne.s32.totalorder %s91, %s107
    %p109 = scmp.eq.s32.totalorder %s15, 0
    %p110 = por %p108, %p109
    %p111 = scmp.le.s32.totalorder 1, %s9
    %p112 = scmp.lt.s32.totalorder %s9, 3
    %p113 = pnand %p111, %p112
    %p114 = pneg %p113
    // Predicated region
    $region9: #{tpu_custom_call.1} parent=5 // pred_check
      _
    $region10: #{tpu_custom_call.1} parent=5 // pred_check_branch
      %116 = sbr.rel (%p113) target = $region12
    $region11: #{tpu_custom_call.1} parent=5 // pred_region
      %s117 = ssub.s32 %s9, 1
      // Predicated region
      $region13: #{tpu_custom_call.1} parent=11 // pred_check
        %p118 = pneg %p56
      $region14: #{tpu_custom_call.1} parent=11 // pred_check_branch
        %120 = sbr.rel (%p118) target = $region16
      $region15: #{tpu_custom_call.1} parent=11 // pred_region
        _
      $region16: #{tpu_custom_call.1} parent=11 // pred_fallthru
        _
      // Predicated region
      $region17: #{tpu_custom_call.1} parent=11 // pred_check
        %p121 = pneg %p77
      $region18: #{tpu_custom_call.1} parent=11 // pred_check_branch
        %123 = sbr.rel (%p121) target = $region20
      $region19: #{tpu_custom_call.1} parent=11 // pred_region
        _
      $region20: #{tpu_custom_call.1} parent=11 // pred_fallthru
        _
    $region12: #{tpu_custom_call.1} parent=5 // pred_fallthru
      _
    %p124 = scmp.lt.s32.totalorder %s9, 2
    // Predicated region
    $region21: #{tpu_custom_call.1} parent=5 // pred_check
      %p125 = pneg %p124
    $region22: #{tpu_custom_call.1} parent=5 // pred_check_branch
      %127 = sbr.rel (%p125) target = $region24
    $region23: #{tpu_custom_call.1} parent=5 // pred_region
      // Predicated region
      $region25: #{tpu_custom_call.1} parent=23 // pred_check
        %p128 = pneg %p29
      $region26: #{tpu_custom_call.1} parent=23 // pred_check_branch
        %130 = sbr.rel (%p128) target = $region28
      $region27: #{tpu_custom_call.1} parent=23 // pred_region
        %s131 = smul.u32 2, %s9
        %p132 = scmp.lt.s32.totalorder %s131, 3
        %s133 = scalar_select %p132, %s131, 3
        %s134 = smul.addr %s133, 4
        %s135 = smul.addr %s134, 8
        %s136 = scalar_lea.vmem %s0, %s135
        %s137 = smul.u32 2, %s9
      $region28: #{tpu_custom_call.1} parent=23 // pred_fallthru
        _
    $region24: #{tpu_custom_call.1} parent=5 // pred_fallthru
      _
    %p138 = scmp.le.s32.totalorder 1, %s9
    %p139 = scmp.lt.s32.totalorder %s9, 3
    %p140 = pnand %p138, %p139
    %p141 = pneg %p140
    // Predicated region
    $region29: #{tpu_custom_call.1} parent=5 // pred_check
      _
    $region30: #{tpu_custom_call.1} parent=5 // pred_check_branch
      %143 = sbr.rel (%p140) target = $region32
    $region31: #{tpu_custom_call.1} parent=5 // pred_region
      %s144 = ssub.s32 %s9, 1
      %s145 = smul.u32 2, %s14
      %p146 = scmp.lt.s32.totalorder %s145, 3
      %s147 = scalar_select %p146, %s145, 3
      %s148 = smul.addr %s147, 4
      %s149 = smul.addr %s148, 8
      %s150 = scalar_lea.vmem %s0, %s149
      %p151 = pneg %p35
      %p152 = pneg %p32
      %p153 = pneg %p56
      %p154 = pneg %p53
      %p155 = pneg %p77
      %p156 = pneg %p74
      %p157 = pneg %p103
      %p158 = pneg %p100
      %s159 = smul.u32 2, %s14
      %p160 = scmp.lt.s32.totalorder %s159, 3
      %s161 = scalar_select %p160, %s159, 3
      %s162 = smul.addr %s161, 12
      %s163 = smul.addr %s162, 8
      %s164 = scalar_lea.vmem %s3, %s163
      %s165 = smul.u32 2, %s14
      %p166 = scmp.lt.s32.totalorder %s165, 3
      %s167 = scalar_select %p166, %s165, 3
      %s168 = smul.addr %s167, 4
      %s169 = smul.addr %s168, 8
      %s170 = scalar_lea.vmem %s0, %s169
      %s171 = smul.u32 2, %s14
      %s172 = smul.u32 2, %s14
      %p173 = scmp.lt.s32.totalorder %s172, 3
      %s174 = scalar_select %p173, %s172, 3
      %s175 = smul.addr %s174, 12
      %s176 = smul.addr %s175, 8
      %s177 = scalar_lea.vmem %s3, %s176
      %s178 = smul.u32 2, %s14
      %v179 = vld [vmem:[%s170] sm:$0xff]
      %v180 = vld [vmem:[%s170 + $0x8] sm:$0xff]
      %v181 = vld [vmem:[%s170 + $0x10] sm:$0xff]
      %v182 = vld [vmem:[%s170 + $0x18] sm:$0xff]
      %v183 = vld [vmem:[%s170 + $0x20] sm:$0xff]
      %v184 = vld [vmem:[%s170 + $0x28] sm:$0xff]
      %v185 = vld [vmem:[%s170 + $0x30] sm:$0xff]
      %v186 = vld [vmem:[%s170 + $0x38] sm:$0xff]
      %v187 = vld [vmem:[%s1] sm:$0xff]
      %v188 = vld [vmem:[%s1 + $0x8] sm:$0xff]
      %v189 = vld [vmem:[%s1 + $0x10] sm:$0xff]
      %v190 = vld [vmem:[%s1 + $0x18] sm:$0x1]
      %v191 = vld [vmem:[%s1 + $0x20] sm:$0xff]
      %v192 = vld [vmem:[%s1 + $0x28] sm:$0xff]
      %v193 = vld [vmem:[%s1 + $0x30] sm:$0xff]
      %v194 = vld [vmem:[%s1 + $0x38] sm:$0x1]
      %v195 = vld [vmem:[%s2] sm:$0xff]
      %v196 = vld [vmem:[%s2 + $0x8] sm:$0xff]
      %v197 = vld [vmem:[%s2 + $0x10] sm:$0xff]
      %v198 = vld [vmem:[%s2 + $0x18] sm:$0xff]
      %v199 = vld [vmem:[%s2 + $0x20] sm:$0xff]
      %v200 = vld [vmem:[%s2 + $0x28] sm:$0xff]
      %v201 = vld [vmem:[%s2 + $0x30] sm:$0xff]
      %v202 = vld [vmem:[%s2 + $0x38] sm:$0xff]
      %v203 = vld [vmem:[%s2 + $0x40] sm:$0xff]
      %v204 = vld [vmem:[%s2 + $0x48] sm:$0xff]
      %v205 = vld [vmem:[%s2 + $0x50] sm:$0xff]
      %v206 = vld [vmem:[%s2 + $0x58] sm:$0xff]
      %v207 = vld [vmem:[%s2 + $0x60] sm:$0xff]
      %v208 = vld [vmem:[%s2 + $0x68] sm:$0xff]
      %v209 = vld [vmem:[%s2 + $0x70] sm:$0xff]
      %v210 = vld [vmem:[%s2 + $0x78] sm:$0xff]
      %v211 = vld [vmem:[%s2 + $0x80] sm:$0xff]
      %v212 = vld [vmem:[%s2 + $0x88] sm:$0xff]
      %v213 = vld [vmem:[%s2 + $0x90] sm:$0xff]
      %v214 = vld [vmem:[%s2 + $0x98] sm:$0xff]
      %v215 = vld [vmem:[%s2 + $0xa0] sm:$0xff]
      %v216 = vld [vmem:[%s2 + $0xa8] sm:$0xff]
      %v217 = vld [vmem:[%s2 + $0xb0] sm:$0xff]
      %v218 = vld [vmem:[%s2 + $0xb8] sm:$0xff]
      %v219 = vld [vmem:[%s2 + $0xc0] sm:$0xff]
      %v220 = vld [vmem:[%s2 + $0xc8] sm:$0xff]
      %v221 = vld [vmem:[%s2 + $0xd0] sm:$0xff]
      %v222 = vld [vmem:[%s2 + $0xd8] sm:$0xff]
      %v223 = vld [vmem:[%s2 + $0xe0] sm:$0xff]
      %v224 = vld [vmem:[%s2 + $0xe8] sm:$0xff]
      %v225 = vld [vmem:[%s2 + $0xf0] sm:$0xff]
      %v226 = vld [vmem:[%s2 + $0xf8] sm:$0xff]
      %vm227 = vcmask 261120
      %v229 = vsel %vm227, %v187, 0
      %v232 = vsel %vm227, %v188, 0
      %v235 = vsel %vm227, %v189, 0
      %v238 = vsel %vm227, %v190, 0
      %240 = vmatprep.subr.mxu0 0.0
      %241 = vmatpush1.msra.mxu0 0.0
      %242 = vmatprep.subr.mxu0 0.0
      %243 = vmatpush1.msra.mxu0 0.0
      %244 = vmatprep.subr.mxu0 0.0
      %245 = vmatpush1.msra.mxu0 0.0
      %246 = vmatprep.subr.mxu0 0.0
      %247 = vmatpush1.msra.mxu0 0.0
      %248 = vmatprep.subr.mxu0 0.0
      %249 = vmatpush1.msra.mxu0 0.0
      %250 = vmatprep.subr.mxu0 0.0
      %251 = vmatpush1.msra.mxu0 0.0
      %252 = vmatprep.subr.mxu0 0.0
      %253 = vmatpush1.msra.mxu0 0.0
      %254 = vmatprep.subr.mxu0 0.0
      %255 = vmatpush1.msra.mxu0 0.0
      %256 = vmatprep.subr.mxu0 0.0
      %257 = vmatpush1.msra.mxu0 0.0
      %258 = vmatprep.subr.mxu0 0.0
      %259 = vmatpush1.msra.mxu0 0.0
      %260 = vmatprep.subr.mxu0 0.0
      %261 = vmatpush1.msra.mxu0 0.0
      %262 = vmatprep.subr.mxu0 0.0
      %263 = vmatpush1.msra.mxu0 0.0
      %264 = vmatprep.subr.mxu0 0.0
      %265 = vmatpush1.msra.mxu0 %v182
      %266 = vmatprep.subr.mxu0 0.0
      %267 = vmatpush1.msra.mxu0 %v181
      %268 = vmatprep.subr.mxu0 0.0
      %269 = vmatpush1.msra.mxu0 %v180
      %270 = vmatprep.subr.mxu0 0.0
      %271 = vmatpush1.msra.mxu0 %v179
      %272 = vmatprep.subr.mxu0 0.0
      %273 = vmatpush2.msra.mxu0 0.0
      %274 = vmatprep.subr.mxu0 0.0
      %275 = vmatpush2.msra.mxu0 0.0
      %276 = vmatprep.subr.mxu0 0.0
      %277 = vmatpush2.msra.mxu0 0.0
      %278 = vmatprep.subr.mxu0 0.0
      %279 = vmatpush2.msra.mxu0 0.0
      %280 = vmatprep.subr.mxu0 0.0
      %281 = vmatpush2.msra.mxu0 0.0
      %282 = vmatprep.subr.mxu0 0.0
      %283 = vmatpush2.msra.mxu0 0.0
      %284 = vmatprep.subr.mxu0 0.0
      %285 = vmatpush2.msra.mxu0 0.0
      %286 = vmatprep.subr.mxu0 0.0
      %287 = vmatpush2.msra.mxu0 0.0
      %288 = vmatprep.subr.mxu0 0.0
      %289 = vmatpush2.msra.mxu0 0.0
      %290 = vmatprep.subr.mxu0 0.0
      %291 = vmatpush2.msra.mxu0 0.0
      %292 = vmatprep.subr.mxu0 0.0
      %293 = vmatpush2.msra.mxu0 0.0
      %294 = vmatprep.subr.mxu0 0.0
      %295 = vmatpush2.msra.mxu0 0.0
      %296 = vmatprep.subr.mxu0 0.0
      %297 = vmatpush2.msra.mxu0 0.0
      %298 = vmatprep.subr.mxu0 0.0
      %299 = vmatpush2.msra.mxu0 0.0
      %300 = vmatprep.subr.mxu0 0.0
      %301 = vmatpush2.msra.mxu0 0.0
      %302 = vmatprep.subr.mxu0 0.0
      %303 = vmatpush2.msra.mxu0 0.0
      %304 = vmatprep.mubr.f32.mxu0 0.0
      %305 = vmatmul.mubr.f32.gmra.mxu0 %v229
      %v306 = vpop.f32.mrf.mxu0
      %v307 = vadd.f32 0.0, %v306
      %v308 = vpop.f32.mrf.mxu0
      %309 = vmatprep.mubr.f32.mxu0 0.0
      %310 = vmatmul.mubr.f32.gmra.mxu0 %v232
      %v311 = vpop.f32.mrf.mxu0
      %v312 = vadd.f32 0.0, %v311
      %v313 = vpop.f32.mrf.mxu0
      %314 = vmatprep.mubr.f32.mxu0 0.0
      %315 = vmatmul.mubr.f32.gmra.mxu0 %v235
      %v316 = vpop.f32.mrf.mxu0
      %v317 = vadd.f32 0.0, %v316
      %v318 = vpop.f32.mrf.mxu0
      %319 = vmatprep.mubr.f32.mxu0 0.0
      %320 = vmatmul.mubr.f32.gmra.mxu0 %v238
      %v321 = vpop.f32.mrf.mxu0
      %v322 = vadd.f32 0.0, %v321
      %v323 = vpop.f32.mrf.mxu0
      %324 = vdwg.mxu0
      %v326 = vsel %vm227, %v191, 0
      %v329 = vsel %vm227, %v192, 0
      %v332 = vsel %vm227, %v193, 0
      %v335 = vsel %vm227, %v194, 0
      %337 = vmatprep.subr.mxu0 0.0
      %338 = vmatpush1.msra.mxu0 0.0
      %339 = vmatprep.subr.mxu0 0.0
      %340 = vmatpush1.msra.mxu0 0.0
      %341 = vmatprep.subr.mxu0 0.0
      %342 = vmatpush1.msra.mxu0 0.0
      %343 = vmatprep.subr.mxu0 0.0
      %344 = vmatpush1.msra.mxu0 0.0
      %345 = vmatprep.subr.mxu0 0.0
      %346 = vmatpush1.msra.mxu0 0.0
      %347 = vmatprep.subr.mxu0 0.0
      %348 = vmatpush1.msra.mxu0 0.0
      %349 = vmatprep.subr.mxu0 0.0
      %350 = vmatpush1.msra.mxu0 0.0
      %351 = vmatprep.subr.mxu0 0.0
      %352 = vmatpush1.msra.mxu0 0.0
      %353 = vmatprep.subr.mxu0 0.0
      %354 = vmatpush1.msra.mxu0 0.0
      %355 = vmatprep.subr.mxu0 0.0
      %356 = vmatpush1.msra.mxu0 0.0
      %357 = vmatprep.subr.mxu0 0.0
      %358 = vmatpush1.msra.mxu0 0.0
      %359 = vmatprep.subr.mxu0 0.0
      %360 = vmatpush1.msra.mxu0 0.0
      %361 = vmatprep.subr.mxu0 0.0
      %362 = vmatpush1.msra.mxu0 %v186
      %363 = vmatprep.subr.mxu0 0.0
      %364 = vmatpush1.msra.mxu0 %v185
      %365 = vmatprep.subr.mxu0 0.0
      %366 = vmatpush1.msra.mxu0 %v184
      %367 = vmatprep.subr.mxu0 0.0
      %368 = vmatpush1.msra.mxu0 %v183
      %369 = vmatprep.subr.mxu0 0.0
      %370 = vmatpush2.msra.mxu0 0.0
      %371 = vmatprep.subr.mxu0 0.0
      %372 = vmatpush2.msra.mxu0 0.0
      %373 = vmatprep.subr.mxu0 0.0
      %374 = vmatpush2.msra.mxu0 0.0
      %375 = vmatprep.subr.mxu0 0.0
      %376 = vmatpush2.msra.mxu0 0.0
      %377 = vmatprep.subr.mxu0 0.0
      %378 = vmatpush2.msra.mxu0 0.0
      %379 = vmatprep.subr.mxu0 0.0
      %380 = vmatpush2.msra.mxu0 0.0
      %381 = vmatprep.subr.mxu0 0.0
      %382 = vmatpush2.msra.mxu0 0.0
      %383 = vmatprep.subr.mxu0 0.0
      %384 = vmatpush2.msra.mxu0 0.0
      %385 = vmatprep.subr.mxu0 0.0
      %386 = vmatpush2.msra.mxu0 0.0
      %387 = vmatprep.subr.mxu0 0.0
      %388 = vmatpush2.msra.mxu0 0.0
      %389 = vmatprep.subr.mxu0 0.0
      %390 = vmatpush2.msra.mxu0 0.0
      %391 = vmatprep.subr.mxu0 0.0
      %392 = vmatpush2.msra.mxu0 0.0
      %393 = vmatprep.subr.mxu0 0.0
      %394 = vmatpush2.msra.mxu0 0.0
      %395 = vmatprep.subr.mxu0 0.0
      %396 = vmatpush2.msra.mxu0 0.0
      %397 = vmatprep.subr.mxu0 0.0
      %398 = vmatpush2.msra.mxu0 0.0
      %399 = vmatprep.subr.mxu0 0.0
      %400 = vmatpush2.msra.mxu0 0.0
      %401 = vmatprep.mubr.f32.mxu0 0.0
      %402 = vmatmul.mubr.f32.gmra.mxu0 %v326
      %v403 = vpop.f32.mrf.mxu0
      %v404 = vadd.f32 0.0, %v403
      %v405 = vpop.f32.mrf.mxu0
      %406 = vmatprep.mubr.f32.mxu0 0.0
      %407 = vmatmul.mubr.f32.gmra.mxu0 %v329
      %v408 = vpop.f32.mrf.mxu0
      %v409 = vadd.f32 0.0, %v408
      %v410 = vpop.f32.mrf.mxu0
      %411 = vmatprep.mubr.f32.mxu0 0.0
      %412 = vmatmul.mubr.f32.gmra.mxu0 %v332
      %v413 = vpop.f32.mrf.mxu0
      %v414 = vadd.f32 0.0, %v413
      %v415 = vpop.f32.mrf.mxu0
      %416 = vmatprep.mubr.f32.mxu0 0.0
      %417 = vmatmul.mubr.f32.gmra.mxu0 %v335
      %v418 = vpop.f32.mrf.mxu0
      %v419 = vadd.f32 0.0, %v418
      %v420 = vpop.f32.mrf.mxu0
      %421 = vdwg.mxu0
      %v423 = vsel %vm227, %v307, 0
      %v426 = vsel %vm227, %v312, 0
      %v429 = vsel %vm227, %v317, 0
      %v432 = vsel %vm227, %v322, 0
      %v435 = vsel %vm227, %v195, 0
      %v438 = vsel %vm227, %v196, 0
      %v441 = vsel %vm227, %v197, 0
      %v444 = vsel %vm227, %v198, 0
      %v447 = vsel %vm227, %v199, 0
      %v450 = vsel %vm227, %v200, 0
      %v453 = vsel %vm227, %v201, 0
      %v456 = vsel %vm227, %v202, 0
      %v459 = vsel %vm227, %v203, 0
      %v462 = vsel %vm227, %v204, 0
      %v465 = vsel %vm227, %v205, 0
      %v468 = vsel %vm227, %v206, 0
      %v471 = vsel %vm227, %v207, 0
      %v474 = vsel %vm227, %v208, 0
      %v477 = vsel %vm227, %v209, 0
      %v480 = vsel %vm227, %v210, 0
      %482 = vmatprep.subr.mxu0 0.0
      %483 = vmatpush1.xpose.msra.mxu0 %v480
      %484 = vmatprep.subr.mxu0 0.0
      %485 = vmatpush1.xpose.msra.mxu0 %v477
      %486 = vmatprep.subr.mxu0 0.0
      %487 = vmatpush1.xpose.msra.mxu0 %v474
      %488 = vmatprep.subr.mxu0 0.0
      %489 = vmatpush1.xpose.msra.mxu0 %v471
      %490 = vmatprep.subr.mxu0 0.0
      %491 = vmatpush1.xpose.msra.mxu0 %v468
      %492 = vmatprep.subr.mxu0 0.0
      %493 = vmatpush1.xpose.msra.mxu0 %v465
      %494 = vmatprep.subr.mxu0 0.0
      %495 = vmatpush1.xpose.msra.mxu0 %v462
      %496 = vmatprep.subr.mxu0 0.0
      %497 = vmatpush1.xpose.msra.mxu0 %v459
      %498 = vmatprep.subr.mxu0 0.0
      %499 = vmatpush1.xpose.msra.mxu0 %v456
      %500 = vmatprep.subr.mxu0 0.0
      %501 = vmatpush1.xpose.msra.mxu0 %v453
      %502 = vmatprep.subr.mxu0 0.0
      %503 = vmatpush1.xpose.msra.mxu0 %v450
      %504 = vmatprep.subr.mxu0 0.0
      %505 = vmatpush1.xpose.msra.mxu0 %v447
      %506 = vmatprep.subr.mxu0 0.0
      %507 = vmatpush1.xpose.msra.mxu0 %v444
      %508 = vmatprep.subr.mxu0 0.0
      %509 = vmatpush1.xpose.msra.mxu0 %v441
      %510 = vmatprep.subr.mxu0 0.0
      %511 = vmatpush1.xpose.msra.mxu0 %v438
      %512 = vmatprep.subr.mxu0 0.0
      %513 = vmatpush1.xpose.msra.mxu0 %v435
      %514 = vmatprep.subr.mxu0 0.0
      %515 = vmatpush2.xpose.msra.mxu0 0.0
      %516 = vmatprep.subr.mxu0 0.0
      %517 = vmatpush2.xpose.msra.mxu0 0.0
      %518 = vmatprep.subr.mxu0 0.0
      %519 = vmatpush2.xpose.msra.mxu0 0.0
      %520 = vmatprep.subr.mxu0 0.0
      %521 = vmatpush2.xpose.msra.mxu0 0.0
      %522 = vmatprep.subr.mxu0 0.0
      %523 = vmatpush2.xpose.msra.mxu0 0.0
      %524 = vmatprep.subr.mxu0 0.0
      %525 = vmatpush2.xpose.msra.mxu0 0.0
      %526 = vmatprep.subr.mxu0 0.0
      %527 = vmatpush2.xpose.msra.mxu0 0.0
      %528 = vmatprep.subr.mxu0 0.0
      %529 = vmatpush2.xpose.msra.mxu0 0.0
      %530 = vmatprep.subr.mxu0 0.0
      %531 = vmatpush2.xpose.msra.mxu0 0.0
      %532 = vmatprep.subr.mxu0 0.0
      %533 = vmatpush2.xpose.msra.mxu0 0.0
      %534 = vmatprep.subr.mxu0 0.0
      %535 = vmatpush2.xpose.msra.mxu0 0.0
      %536 = vmatprep.subr.mxu0 0.0
      %537 = vmatpush2.xpose.msra.mxu0 0.0
      %538 = vmatprep.subr.mxu0 0.0
      %539 = vmatpush2.xpose.msra.mxu0 0.0
      %540 = vmatprep.subr.mxu0 0.0
      %541 = vmatpush2.xpose.msra.mxu0 0.0
      %542 = vmatprep.subr.mxu0 0.0
      %543 = vmatpush2.xpose.msra.mxu0 0.0
      %544 = vmatprep.subr.mxu0 0.0
      %545 = vmatpush2.xpose.msra.mxu0 0.0
      %546 = vmatprep.mubr.f32.mxu0 0.0
      %547 = vmatmul.mubr.f32.gmra.mxu0 %v423
      %v548 = vpop.f32.mrf.mxu0
      %v549 = vadd.f32 0.0, %v548
      %v550 = vpop.f32.mrf.mxu0
      %551 = vmatprep.mubr.f32.mxu0 0.0
      %552 = vmatmul.mubr.f32.gmra.mxu0 %v426
      %v553 = vpop.f32.mrf.mxu0
      %v554 = vadd.f32 0.0, %v553
      %v555 = vpop.f32.mrf.mxu0
      %556 = vmatprep.mubr.f32.mxu0 0.0
      %557 = vmatmul.mubr.f32.gmra.mxu0 %v429
      %v558 = vpop.f32.mrf.mxu0
      %v559 = vadd.f32 0.0, %v558
      %v560 = vpop.f32.mrf.mxu0
      %561 = vmatprep.mubr.f32.mxu0 0.0
      %562 = vmatmul.mubr.f32.gmra.mxu0 %v432
      %v563 = vpop.f32.mrf.mxu0
      %v564 = vadd.f32 0.0, %v563
      %v565 = vpop.f32.mrf.mxu0
      %566 = vdwg.mxu0
      %v568 = vsel %vm227, %v404, 0
      %v571 = vsel %vm227, %v409, 0
      %v574 = vsel %vm227, %v414, 0
      %v577 = vsel %vm227, %v419, 0
      %v580 = vsel %vm227, %v211, 0
      %v583 = vsel %vm227, %v212, 0
      %v586 = vsel %vm227, %v213, 0
      %v589 = vsel %vm227, %v214, 0
      %v592 = vsel %vm227, %v215, 0
      %v595 = vsel %vm227, %v216, 0
      %v598 = vsel %vm227, %v217, 0
      %v601 = vsel %vm227, %v218, 0
      %v604 = vsel %vm227, %v219, 0
      %v607 = vsel %vm227, %v220, 0
      %v610 = vsel %vm227, %v221, 0
      %v613 = vsel %vm227, %v222, 0
      %v616 = vsel %vm227, %v223, 0
      %v619 = vsel %vm227, %v224, 0
      %v622 = vsel %vm227, %v225, 0
      %v625 = vsel %vm227, %v226, 0
      %627 = vmatprep.subr.mxu0 0.0
      %628 = vmatpush1.xpose.msra.mxu0 %v625
      %629 = vmatprep.subr.mxu0 0.0
      %630 = vmatpush1.xpose.msra.mxu0 %v622
      %631 = vmatprep.subr.mxu0 0.0
      %632 = vmatpush1.xpose.msra.mxu0 %v619
      %633 = vmatprep.subr.mxu0 0.0
      %634 = vmatpush1.xpose.msra.mxu0 %v616
      %635 = vmatprep.subr.mxu0 0.0
      %636 = vmatpush1.xpose.msra.mxu0 %v613
      %637 = vmatprep.subr.mxu0 0.0
      %638 = vmatpush1.xpose.msra.mxu0 %v610
      %639 = vmatprep.subr.mxu0 0.0
      %640 = vmatpush1.xpose.msra.mxu0 %v607
      %641 = vmatprep.subr.mxu0 0.0
      %642 = vmatpush1.xpose.msra.mxu0 %v604
      %643 = vmatprep.subr.mxu0 0.0
      %644 = vmatpush1.xpose.msra.mxu0 %v601
      %645 = vmatprep.subr.mxu0 0.0
      %646 = vmatpush1.xpose.msra.mxu0 %v598
      %647 = vmatprep.subr.mxu0 0.0
      %648 = vmatpush1.xpose.msra.mxu0 %v595
      %649 = vmatprep.subr.mxu0 0.0
      %650 = vmatpush1.xpose.msra.mxu0 %v592
      %651 = vmatprep.subr.mxu0 0.0
      %652 = vmatpush1.xpose.msra.mxu0 %v589
      %653 = vmatprep.subr.mxu0 0.0
      %654 = vmatpush1.xpose.msra.mxu0 %v586
      %655 = vmatprep.subr.mxu0 0.0
      %656 = vmatpush1.xpose.msra.mxu0 %v583
      %657 = vmatprep.subr.mxu0 0.0
      %658 = vmatpush1.xpose.msra.mxu0 %v580
      %659 = vmatprep.subr.mxu0 0.0
      %660 = vmatpush2.xpose.msra.mxu0 0.0
      %661 = vmatprep.subr.mxu0 0.0
      %662 = vmatpush2.xpose.msra.mxu0 0.0
      %663 = vmatprep.subr.mxu0 0.0
      %664 = vmatpush2.xpose.msra.mxu0 0.0
      %665 = vmatprep.subr.mxu0 0.0
      %666 = vmatpush2.xpose.msra.mxu0 0.0
      %667 = vmatprep.subr.mxu0 0.0
      %668 = vmatpush2.xpose.msra.mxu0 0.0
      %669 = vmatprep.subr.mxu0 0.0
      %670 = vmatpush2.xpose.msra.mxu0 0.0
      %671 = vmatprep.subr.mxu0 0.0
      %672 = vmatpush2.xpose.msra.mxu0 0.0
      %673 = vmatprep.subr.mxu0 0.0
      %674 = vmatpush2.xpose.msra.mxu0 0.0
      %675 = vmatprep.subr.mxu0 0.0
      %676 = vmatpush2.xpose.msra.mxu0 0.0
      %677 = vmatprep.subr.mxu0 0.0
      %678 = vmatpush2.xpose.msra.mxu0 0.0
      %679 = vmatprep.subr.mxu0 0.0
      %680 = vmatpush2.xpose.msra.mxu0 0.0
      %681 = vmatprep.subr.mxu0 0.0
      %682 = vmatpush2.xpose.msra.mxu0 0.0
      %683 = vmatprep.subr.mxu0 0.0
      %684 = vmatpush2.xpose.msra.mxu0 0.0
      %685 = vmatprep.subr.mxu0 0.0
      %686 = vmatpush2.xpose.msra.mxu0 0.0
      %687 = vmatprep.subr.mxu0 0.0
      %688 = vmatpush2.xpose.msra.mxu0 0.0
      %689 = vmatprep.subr.mxu0 0.0
      %690 = vmatpush2.xpose.msra.mxu0 0.0
      %691 = vmatprep.mubr.f32.mxu0 0.0
      %692 = vmatmul.mubr.f32.gmra.mxu0 %v568
      %v693 = vpop.f32.mrf.mxu0
      %v694 = vadd.f32 0.0, %v693
      %v695 = vpop.f32.mrf.mxu0
      %696 = vmatprep.mubr.f32.mxu0 0.0
      %697 = vmatmul.mubr.f32.gmra.mxu0 %v571
      %v698 = vpop.f32.mrf.mxu0
      %v699 = vadd.f32 0.0, %v698
      %v700 = vpop.f32.mrf.mxu0
      %701 = vmatprep.mubr.f32.mxu0 0.0
      %702 = vmatmul.mubr.f32.gmra.mxu0 %v574
      %v703 = vpop.f32.mrf.mxu0
      %v704 = vadd.f32 0.0, %v703
      %v705 = vpop.f32.mrf.mxu0
      %706 = vmatprep.mubr.f32.mxu0 0.0
      %707 = vmatmul.mubr.f32.gmra.mxu0 %v577
      %v708 = vpop.f32.mrf.mxu0
      %v709 = vadd.f32 0.0, %v708
      %v710 = vpop.f32.mrf.mxu0
      %711 = vdwg.mxu0
      %712 = vst [vmem:[%s177] sm:$0xff] %v549
      %713 = vst [vmem:[%s177 + $0x8] sm:$0xff] %v554
      %714 = vst [vmem:[%s177 + $0x10] sm:$0xff] %v559
      %715 = vst [vmem:[%s177 + $0x18] sm:$0x1] %v564
      %s716 = scalar_lea.vmem %s177, 96
      %717 = vst [vmem:[%s716] sm:$0xff] %v694
      %718 = vst [vmem:[%s716 + $0x8] sm:$0xff] %v699
      %719 = vst [vmem:[%s716 + $0x10] sm:$0xff] %v704
      %720 = vst [vmem:[%s716 + $0x18] sm:$0x1] %v709
      %s721 = scalar_lea.vmem %s1, 64
      %v722 = vld [vmem:[%s721] sm:$0xff]
      %v723 = vld [vmem:[%s721 + $0x8] sm:$0xff]
      %v724 = vld [vmem:[%s721 + $0x10] sm:$0xff]
      %v725 = vld [vmem:[%s721 + $0x18] sm:$0x1]
      %v726 = vld [vmem:[%s721 + $0x20] sm:$0xff]
      %v727 = vld [vmem:[%s721 + $0x28] sm:$0xff]
      %v728 = vld [vmem:[%s721 + $0x30] sm:$0xff]
      %v729 = vld [vmem:[%s721 + $0x38] sm:$0x1]
      %s730 = scalar_lea.vmem %s2, 256
      %v731 = vld [vmem:[%s730] sm:$0xff]
      %v732 = vld [vmem:[%s730 + $0x8] sm:$0xff]
      %v733 = vld [vmem:[%s730 + $0x10] sm:$0xff]
      %v734 = vld [vmem:[%s730 + $0x18] sm:$0xff]
      %v735 = vld [vmem:[%s730 + $0x20] sm:$0xff]
      %v736 = vld [vmem:[%s730 + $0x28] sm:$0xff]
      %v737 = vld [vmem:[%s730 + $0x30] sm:$0xff]
      %v738 = vld [vmem:[%s730 + $0x38] sm:$0xff]
      %v739 = vld [vmem:[%s730 + $0x40] sm:$0xff]
      %v740 = vld [vmem:[%s730 + $0x48] sm:$0xff]
      %v741 = vld [vmem:[%s730 + $0x50] sm:$0xff]
      %v742 = vld [vmem:[%s730 + $0x58] sm:$0xff]
      %v743 = vld [vmem:[%s730 + $0x60] sm:$0xff]
      %v744 = vld [vmem:[%s730 + $0x68] sm:$0xff]
      %v745 = vld [vmem:[%s730 + $0x70] sm:$0xff]
      %v746 = vld [vmem:[%s730 + $0x78] sm:$0xff]
      %v747 = vld [vmem:[%s730 + $0x80] sm:$0xff]
      %v748 = vld [vmem:[%s730 + $0x88] sm:$0xff]
      %v749 = vld [vmem:[%s730 + $0x90] sm:$0xff]
      %v750 = vld [vmem:[%s730 + $0x98] sm:$0xff]
      %v751 = vld [vmem:[%s730 + $0xa0] sm:$0xff]
      %v752 = vld [vmem:[%s730 + $0xa8] sm:$0xff]
      %v753 = vld [vmem:[%s730 + $0xb0] sm:$0xff]
      %v754 = vld [vmem:[%s730 + $0xb8] sm:$0xff]
      %v755 = vld [vmem:[%s730 + $0xc0] sm:$0xff]
      %v756 = vld [vmem:[%s730 + $0xc8] sm:$0xff]
      %v757 = vld [vmem:[%s730 + $0xd0] sm:$0xff]
      %v758 = vld [vmem:[%s730 + $0xd8] sm:$0xff]
      %v759 = vld [vmem:[%s730 + $0xe0] sm:$0xff]
      %v760 = vld [vmem:[%s730 + $0xe8] sm:$0xff]
      %v761 = vld [vmem:[%s730 + $0xf0] sm:$0xff]
      %v762 = vld [vmem:[%s730 + $0xf8] sm:$0xff]
      %v764 = vsel %vm227, %v722, 0
      %v767 = vsel %vm227, %v723, 0
      %v770 = vsel %vm227, %v724, 0
      %v773 = vsel %vm227, %v725, 0
      %775 = vmatprep.subr.mxu0 0.0
      %776 = vmatpush1.msra.mxu0 0.0
      %777 = vmatprep.subr.mxu0 0.0
      %778 = vmatpush1.msra.mxu0 0.0
      %779 = vmatprep.subr.mxu0 0.0
      %780 = vmatpush1.msra.mxu0 0.0
      %781 = vmatprep.subr.mxu0 0.0
      %782 = vmatpush1.msra.mxu0 0.0
      %783 = vmatprep.subr.mxu0 0.0
      %784 = vmatpush1.msra.mxu0 0.0
      %785 = vmatprep.subr.mxu0 0.0
      %786 = vmatpush1.msra.mxu0 0.0
      %787 = vmatprep.subr.mxu0 0.0
      %788 = vmatpush1.msra.mxu0 0.0
      %789 = vmatprep.subr.mxu0 0.0
      %790 = vmatpush1.msra.mxu0 0.0
      %791 = vmatprep.subr.mxu0 0.0
      %792 = vmatpush1.msra.mxu0 0.0
      %793 = vmatprep.subr.mxu0 0.0
      %794 = vmatpush1.msra.mxu0 0.0
      %795 = vmatprep.subr.mxu0 0.0
      %796 = vmatpush1.msra.mxu0 0.0
      %797 = vmatprep.subr.mxu0 0.0
      %798 = vmatpush1.msra.mxu0 0.0
      %799 = vmatprep.subr.mxu0 0.0
      %800 = vmatpush1.msra.mxu0 %v182
      %801 = vmatprep.subr.mxu0 0.0
      %802 = vmatpush1.msra.mxu0 %v181
      %803 = vmatprep.subr.mxu0 0.0
      %804 = vmatpush1.msra.mxu0 %v180
      %805 = vmatprep.subr.mxu0 0.0
      %806 = vmatpush1.msra.mxu0 %v179
      %807 = vmatprep.subr.mxu0 0.0
      %808 = vmatpush2.msra.mxu0 0.0
      %809 = vmatprep.subr.mxu0 0.0
      %810 = vmatpush2.msra.mxu0 0.0
      %811 = vmatprep.subr.mxu0 0.0
      %812 = vmatpush2.msra.mxu0 0.0
      %813 = vmatprep.subr.mxu0 0.0
      %814 = vmatpush2.msra.mxu0 0.0
      %815 = vmatprep.subr.mxu0 0.0
      %816 = vmatpush2.msra.mxu0 0.0
      %817 = vmatprep.subr.mxu0 0.0
      %818 = vmatpush2.msra.mxu0 0.0
      %819 = vmatprep.subr.mxu0 0.0
      %820 = vmatpush2.msra.mxu0 0.0
      %821 = vmatprep.subr.mxu0 0.0
      %822 = vmatpush2.msra.mxu0 0.0
      %823 = vmatprep.subr.mxu0 0.0
      %824 = vmatpush2.msra.mxu0 0.0
      %825 = vmatprep.subr.mxu0 0.0
      %826 = vmatpush2.msra.mxu0 0.0
      %827 = vmatprep.subr.mxu0 0.0
      %828 = vmatpush2.msra.mxu0 0.0
      %829 = vmatprep.subr.mxu0 0.0
      %830 = vmatpush2.msra.mxu0 0.0
      %831 = vmatprep.subr.mxu0 0.0
      %832 = vmatpush2.msra.mxu0 0.0
      %833 = vmatprep.subr.mxu0 0.0
      %834 = vmatpush2.msra.mxu0 0.0
      %835 = vmatprep.subr.mxu0 0.0
      %836 = vmatpush2.msra.mxu0 0.0
      %837 = vmatprep.subr.mxu0 0.0
      %838 = vmatpush2.msra.mxu0 0.0
      %839 = vmatprep.mubr.f32.mxu0 0.0
      %840 = vmatmul.mubr.f32.gmra.mxu0 %v764
      %v841 = vpop.f32.mrf.mxu0
      %v842 = vadd.f32 0.0, %v841
      %v843 = vpop.f32.mrf.mxu0
      %844 = vmatprep.mubr.f32.mxu0 0.0
      %845 = vmatmul.mubr.f32.gmra.mxu0 %v767
      %v846 = vpop.f32.mrf.mxu0
      %v847 = vadd.f32 0.0, %v846
      %v848 = vpop.f32.mrf.mxu0
      %849 = vmatprep.mubr.f32.mxu0 0.0
      %850 = vmatmul.mubr.f32.gmra.mxu0 %v770
      %v851 = vpop.f32.mrf.mxu0
      %v852 = vadd.f32 0.0, %v851
      %v853 = vpop.f32.mrf.mxu0
      %854 = vmatprep.mubr.f32.mxu0 0.0
      %855 = vmatmul.mubr.f32.gmra.mxu0 %v773
      %v856 = vpop.f32.mrf.mxu0
      %v857 = vadd.f32 0.0, %v856
      %v858 = vpop.f32.mrf.mxu0
      %859 = vdwg.mxu0
      %v861 = vsel %vm227, %v726, 0
      %v864 = vsel %vm227, %v727, 0
      %v867 = vsel %vm227, %v728, 0
      %v870 = vsel %vm227, %v729, 0
      %872 = vmatprep.subr.mxu0 0.0
      %873 = vmatpush1.msra.mxu0 0.0
      %874 = vmatprep.subr.mxu0 0.0
      %875 = vmatpush1.msra.mxu0 0.0
      %876 = vmatprep.subr.mxu0 0.0
      %877 = vmatpush1.msra.mxu0 0.0
      %878 = vmatprep.subr.mxu0 0.0
      %879 = vmatpush1.msra.mxu0 0.0
      %880 = vmatprep.subr.mxu0 0.0
      %881 = vmatpush1.msra.mxu0 0.0
      %882 = vmatprep.subr.mxu0 0.0
      %883 = vmatpush1.msra.mxu0 0.0
      %884 = vmatprep.subr.mxu0 0.0
      %885 = vmatpush1.msra.mxu0 0.0
      %886 = vmatprep.subr.mxu0 0.0
      %887 = vmatpush1.msra.mxu0 0.0
      %888 = vmatprep.subr.mxu0 0.0
      %889 = vmatpush1.msra.mxu0 0.0
      %890 = vmatprep.subr.mxu0 0.0
      %891 = vmatpush1.msra.mxu0 0.0
      %892 = vmatprep.subr.mxu0 0.0
      %893 = vmatpush1.msra.mxu0 0.0
      %894 = vmatprep.subr.mxu0 0.0
      %895 = vmatpush1.msra.mxu0 0.0
      %896 = vmatprep.subr.mxu0 0.0
      %897 = vmatpush1.msra.mxu0 %v186
      %898 = vmatprep.subr.mxu0 0.0
      %899 = vmatpush1.msra.mxu0 %v185
      %900 = vmatprep.subr.mxu0 0.0
      %901 = vmatpush1.msra.mxu0 %v184
      %902 = vmatprep.subr.mxu0 0.0
      %903 = vmatpush1.msra.mxu0 %v183
      %904 = vmatprep.subr.mxu0 0.0
      %905 = vmatpush2.msra.mxu0 0.0
      %906 = vmatprep.subr.mxu0 0.0
      %907 = vmatpush2.msra.mxu0 0.0
      %908 = vmatprep.subr.mxu0 0.0
      %909 = vmatpush2.msra.mxu0 0.0
      %910 = vmatprep.subr.mxu0 0.0
      %911 = vmatpush2.msra.mxu0 0.0
      %912 = vmatprep.subr.mxu0 0.0
      %913 = vmatpush2.msra.mxu0 0.0
      %914 = vmatprep.subr.mxu0 0.0
      %915 = vmatpush2.msra.mxu0 0.0
      %916 = vmatprep.subr.mxu0 0.0
      %917 = vmatpush2.msra.mxu0 0.0
      %918 = vmatprep.subr.mxu0 0.0
      %919 = vmatpush2.msra.mxu0 0.0
      %920 = vmatprep.subr.mxu0 0.0
      %921 = vmatpush2.msra.mxu0 0.0
      %922 = vmatprep.subr.mxu0 0.0
      %923 = vmatpush2.msra.mxu0 0.0
      %924 = vmatprep.subr.mxu0 0.0
      %925 = vmatpush2.msra.mxu0 0.0
      %926 = vmatprep.subr.mxu0 0.0
      %927 = vmatpush2.msra.mxu0 0.0
      %928 = vmatprep.subr.mxu0 0.0
      %929 = vmatpush2.msra.mxu0 0.0
      %930 = vmatprep.subr.mxu0 0.0
      %931 = vmatpush2.msra.mxu0 0.0
      %932 = vmatprep.subr.mxu0 0.0
      %933 = vmatpush2.msra.mxu0 0.0
      %934 = vmatprep.subr.mxu0 0.0
      %935 = vmatpush2.msra.mxu0 0.0
      %936 = vmatprep.mubr.f32.mxu0 0.0
      %937 = vmatmul.mubr.f32.gmra.mxu0 %v861
      %v938 = vpop.f32.mrf.mxu0
      %v939 = vadd.f32 0.0, %v938
      %v940 = vpop.f32.mrf.mxu0
      %941 = vmatprep.mubr.f32.mxu0 0.0
      %942 = vmatmul.mubr.f32.gmra.mxu0 %v864
      %v943 = vpop.f32.mrf.mxu0
      %v944 = vadd.f32 0.0, %v943
      %v945 = vpop.f32.mrf.mxu0
      %946 = vmatprep.mubr.f32.mxu0 0.0
      %947 = vmatmul.mubr.f32.gmra.mxu0 %v867
      %v948 = vpop.f32.mrf.mxu0
      %v949 = vadd.f32 0.0, %v948
      %v950 = vpop.f32.mrf.mxu0
      %951 = vmatprep.mubr.f32.mxu0 0.0
      %952 = vmatmul.mubr.f32.gmra.mxu0 %v870
      %v953 = vpop.f32.mrf.mxu0
      %v954 = vadd.f32 0.0, %v953
      %v955 = vpop.f32.mrf.mxu0
      %956 = vdwg.mxu0
      %v958 = vsel %vm227, %v842, 0
      %v961 = vsel %vm227, %v847, 0
      %v964 = vsel %vm227, %v852, 0
      %v967 = vsel %vm227, %v857, 0
      %v970 = vsel %vm227, %v731, 0
      %v973 = vsel %vm227, %v732, 0
      %v976 = vsel %vm227, %v733, 0
      %v979 = vsel %vm227, %v734, 0
      %v982 = vsel %vm227, %v735, 0
      %v985 = vsel %vm227, %v736, 0
      %v988 = vsel %vm227, %v737, 0
      %v991 = vsel %vm227, %v738, 0
      %v994 = vsel %vm227, %v739, 0
      %v997 = vsel %vm227, %v740, 0
      %v1000 = vsel %vm227, %v741, 0
      %v1003 = vsel %vm227, %v742, 0
      %v1006 = vsel %vm227, %v743, 0
      %v1009 = vsel %vm227, %v744, 0
      %v1012 = vsel %vm227, %v745, 0
      %v1015 = vsel %vm227, %v746, 0
      %1017 = vmatprep.subr.mxu0 0.0
      %1018 = vmatpush1.xpose.msra.mxu0 %v1015
      %1019 = vmatprep.subr.mxu0 0.0
      %1020 = vmatpush1.xpose.msra.mxu0 %v1012
      %1021 = vmatprep.subr.mxu0 0.0
      %1022 = vmatpush1.xpose.msra.mxu0 %v1009
      %1023 = vmatprep.subr.mxu0 0.0
      %1024 = vmatpush1.xpose.msra.mxu0 %v1006
      %1025 = vmatprep.subr.mxu0 0.0
      %1026 = vmatpush1.xpose.msra.mxu0 %v1003
      %1027 = vmatprep.subr.mxu0 0.0
      %1028 = vmatpush1.xpose.msra.mxu0 %v1000
      %1029 = vmatprep.subr.mxu0 0.0
      %1030 = vmatpush1.xpose.msra.mxu0 %v997
      %1031 = vmatprep.subr.mxu0 0.0
      %1032 = vmatpush1.xpose.msra.mxu0 %v994
      %1033 = vmatprep.subr.mxu0 0.0
      %1034 = vmatpush1.xpose.msra.mxu0 %v991
      %1035 = vmatprep.subr.mxu0 0.0
      %1036 = vmatpush1.xpose.msra.mxu0 %v988
      %1037 = vmatprep.subr.mxu0 0.0
      %1038 = vmatpush1.xpose.msra.mxu0 %v985
      %1039 = vmatprep.subr.mxu0 0.0
      %1040 = vmatpush1.xpose.msra.mxu0 %v982
      %1041 = vmatprep.subr.mxu0 0.0
      %1042 = vmatpush1.xpose.msra.mxu0 %v979
      %1043 = vmatprep.subr.mxu0 0.0
      %1044 = vmatpush1.xpose.msra.mxu0 %v976
      %1045 = vmatprep.subr.mxu0 0.0
      %1046 = vmatpush1.xpose.msra.mxu0 %v973
      %1047 = vmatprep.subr.mxu0 0.0
      %1048 = vmatpush1.xpose.msra.mxu0 %v970
      %1049 = vmatprep.subr.mxu0 0.0
      %1050 = vmatpush2.xpose.msra.mxu0 0.0
      %1051 = vmatprep.subr.mxu0 0.0
      %1052 = vmatpush2.xpose.msra.mxu0 0.0
      %1053 = vmatprep.subr.mxu0 0.0
      %1054 = vmatpush2.xpose.msra.mxu0 0.0
      %1055 = vmatprep.subr.mxu0 0.0
      %1056 = vmatpush2.xpose.msra.mxu0 0.0
      %1057 = vmatprep.subr.mxu0 0.0
      %1058 = vmatpush2.xpose.msra.mxu0 0.0
      %1059 = vmatprep.subr.mxu0 0.0
      %1060 = vmatpush2.xpose.msra.mxu0 0.0
      %1061 = vmatprep.subr.mxu0 0.0
      %1062 = vmatpush2.xpose.msra.mxu0 0.0
      %1063 = vmatprep.subr.mxu0 0.0
      %1064 = vmatpush2.xpose.msra.mxu0 0.0
      %1065 = vmatprep.subr.mxu0 0.0
      %1066 = vmatpush2.xpose.msra.mxu0 0.0
      %1067 = vmatprep.subr.mxu0 0.0
      %1068 = vmatpush2.xpose.msra.mxu0 0.0
      %1069 = vmatprep.subr.mxu0 0.0
      %1070 = vmatpush2.xpose.msra.mxu0 0.0
      %1071 = vmatprep.subr.mxu0 0.0
      %1072 = vmatpush2.xpose.msra.mxu0 0.0
      %1073 = vmatprep.subr.mxu0 0.0
      %1074 = vmatpush2.xpose.msra.mxu0 0.0
      %1075 = vmatprep.subr.mxu0 0.0
      %1076 = vmatpush2.xpose.msra.mxu0 0.0
      %1077 = vmatprep.subr.mxu0 0.0
      %1078 = vmatpush2.xpose.msra.mxu0 0.0
      %1079 = vmatprep.subr.mxu0 0.0
      %1080 = vmatpush2.xpose.msra.mxu0 0.0
      %1081 = vmatprep.mubr.f32.mxu0 0.0
      %1082 = vmatmul.mubr.f32.gmra.mxu0 %v958
      %v1083 = vpop.f32.mrf.mxu0
      %v1084 = vadd.f32 0.0, %v1083
      %v1085 = vpop.f32.mrf.mxu0
      %1086 = vmatprep.mubr.f32.mxu0 0.0
      %1087 = vmatmul.mubr.f32.gmra.mxu0 %v961
      %v1088 = vpop.f32.mrf.mxu0
      %v1089 = vadd.f32 0.0, %v1088
      %v1090 = vpop.f32.mrf.mxu0
      %1091 = vmatprep.mubr.f32.mxu0 0.0
      %1092 = vmatmul.mubr.f32.gmra.mxu0 %v964
      %v1093 = vpop.f32.mrf.mxu0
      %v1094 = vadd.f32 0.0, %v1093
      %v1095 = vpop.f32.mrf.mxu0
      %1096 = vmatprep.mubr.f32.mxu0 0.0
      %1097 = vmatmul.mubr.f32.gmra.mxu0 %v967
      %v1098 = vpop.f32.mrf.mxu0
      %v1099 = vadd.f32 0.0, %v1098
      %v1100 = vpop.f32.mrf.mxu0
      %1101 = vdwg.mxu0
      %v1103 = vsel %vm227, %v939, 0
      %v1106 = vsel %vm227, %v944, 0
      %v1109 = vsel %vm227, %v949, 0
      %v1112 = vsel %vm227, %v954, 0
      %v1115 = vsel %vm227, %v747, 0
      %v1118 = vsel %vm227, %v748, 0
      %v1121 = vsel %vm227, %v749, 0
      %v1124 = vsel %vm227, %v750, 0
      %v1127 = vsel %vm227, %v751, 0
      %v1130 = vsel %vm227, %v752, 0
      %v1133 = vsel %vm227, %v753, 0
      %v1136 = vsel %vm227, %v754, 0
      %v1139 = vsel %vm227, %v755, 0
      %v1142 = vsel %vm227, %v756, 0
      %v1145 = vsel %vm227, %v757, 0
      %v1148 = vsel %vm227, %v758, 0
      %v1151 = vsel %vm227, %v759, 0
      %v1154 = vsel %vm227, %v760, 0
      %v1157 = vsel %vm227, %v761, 0
      %v1160 = vsel %vm227, %v762, 0
      %1162 = vmatprep.subr.mxu0 0.0
      %1163 = vmatpush1.xpose.msra.mxu0 %v1160
      %1164 = vmatprep.subr.mxu0 0.0
      %1165 = vmatpush1.xpose.msra.mxu0 %v1157
      %1166 = vmatprep.subr.mxu0 0.0
      %1167 = vmatpush1.xpose.msra.mxu0 %v1154
      %1168 = vmatprep.subr.mxu0 0.0
      %1169 = vmatpush1.xpose.msra.mxu0 %v1151
      %1170 = vmatprep.subr.mxu0 0.0
      %1171 = vmatpush1.xpose.msra.mxu0 %v1148
      %1172 = vmatprep.subr.mxu0 0.0
      %1173 = vmatpush1.xpose.msra.mxu0 %v1145
      %1174 = vmatprep.subr.mxu0 0.0
      %1175 = vmatpush1.xpose.msra.mxu0 %v1142
      %1176 = vmatprep.subr.mxu0 0.0
      %1177 = vmatpush1.xpose.msra.mxu0 %v1139
      %1178 = vmatprep.subr.mxu0 0.0
      %1179 = vmatpush1.xpose.msra.mxu0 %v1136
      %1180 = vmatprep.subr.mxu0 0.0
      %1181 = vmatpush1.xpose.msra.mxu0 %v1133
      %1182 = vmatprep.subr.mxu0 0.0
      %1183 = vmatpush1.xpose.msra.mxu0 %v1130
      %1184 = vmatprep.subr.mxu0 0.0
      %1185 = vmatpush1.xpose.msra.mxu0 %v1127
      %1186 = vmatprep.subr.mxu0 0.0
      %1187 = vmatpush1.xpose.msra.mxu0 %v1124
      %1188 = vmatprep.subr.mxu0 0.0
      %1189 = vmatpush1.xpose.msra.mxu0 %v1121
      %1190 = vmatprep.subr.mxu0 0.0
      %1191 = vmatpush1.xpose.msra.mxu0 %v1118
      %1192 = vmatprep.subr.mxu0 0.0
      %1193 = vmatpush1.xpose.msra.mxu0 %v1115
      %1194 = vmatprep.subr.mxu0 0.0
      %1195 = vmatpush2.xpose.msra.mxu0 0.0
      %1196 = vmatprep.subr.mxu0 0.0
      %1197 = vmatpush2.xpose.msra.mxu0 0.0
      %1198 = vmatprep.subr.mxu0 0.0
      %1199 = vmatpush2.xpose.msra.mxu0 0.0
      %1200 = vmatprep.subr.mxu0 0.0
      %1201 = vmatpush2.xpose.msra.mxu0 0.0
      %1202 = vmatprep.subr.mxu0 0.0
      %1203 = vmatpush2.xpose.msra.mxu0 0.0
      %1204 = vmatprep.subr.mxu0 0.0
      %1205 = vmatpush2.xpose.msra.mxu0 0.0
      %1206 = vmatprep.subr.mxu0 0.0
      %1207 = vmatpush2.xpose.msra.mxu0 0.0
      %1208 = vmatprep.subr.mxu0 0.0
      %1209 = vmatpush2.xpose.msra.mxu0 0.0
      %1210 = vmatprep.subr.mxu0 0.0
      %1211 = vmatpush2.xpose.msra.mxu0 0.0
      %1212 = vmatprep.subr.mxu0 0.0
      %1213 = vmatpush2.xpose.msra.mxu0 0.0
      %1214 = vmatprep.subr.mxu0 0.0
      %1215 = vmatpush2.xpose.msra.mxu0 0.0
      %1216 = vmatprep.subr.mxu0 0.0
      %1217 = vmatpush2.xpose.msra.mxu0 0.0
      %1218 = vmatprep.subr.mxu0 0.0
      %1219 = vmatpush2.xpose.msra.mxu0 0.0
      %1220 = vmatprep.subr.mxu0 0.0
      %1221 = vmatpush2.xpose.msra.mxu0 0.0
      %1222 = vmatprep.subr.mxu0 0.0
      %1223 = vmatpush2.xpose.msra.mxu0 0.0
      %1224 = vmatprep.subr.mxu0 0.0
      %1225 = vmatpush2.xpose.msra.mxu0 0.0
      %1226 = vmatprep.mubr.f32.mxu0 0.0
      %1227 = vmatmul.mubr.f32.gmra.mxu0 %v1103
      %v1228 = vpop.f32.mrf.mxu0
      %v1229 = vadd.f32 0.0, %v1228
      %v1230 = vpop.f32.mrf.mxu0
      %1231 = vmatprep.mubr.f32.mxu0 0.0
      %1232 = vmatmul.mubr.f32.gmra.mxu0 %v1106
      %v1233 = vpop.f32.mrf.mxu0
      %v1234 = vadd.f32 0.0, %v1233
      %v1235 = vpop.f32.mrf.mxu0
      %1236 = vmatprep.mubr.f32.mxu0 0.0
      %1237 = vmatmul.mubr.f32.gmra.mxu0 %v1109
      %v1238 = vpop.f32.mrf.mxu0
      %v1239 = vadd.f32 0.0, %v1238
      %v1240 = vpop.f32.mrf.mxu0
      %1241 = vmatprep.mubr.f32.mxu0 0.0
      %1242 = vmatmul.mubr.f32.gmra.mxu0 %v1112
      %v1243 = vpop.f32.mrf.mxu0
      %v1244 = vadd.f32 0.0, %v1243
      %v1245 = vpop.f32.mrf.mxu0
      %1246 = vdwg.mxu0
      %s1247 = scalar_lea.vmem %s177, 32
      %1248 = vst [vmem:[%s1247] sm:$0xff] %v1084
      %1249 = vst [vmem:[%s1247 + $0x8] sm:$0xff] %v1089
      %1250 = vst [vmem:[%s1247 + $0x10] sm:$0xff] %v1094
      %1251 = vst [vmem:[%s1247 + $0x18] sm:$0x1] %v1099
      %s1252 = scalar_lea.vmem %s177, 128
      %1253 = vst [vmem:[%s1252] sm:$0xff] %v1229
      %1254 = vst [vmem:[%s1252 + $0x8] sm:$0xff] %v1234
      %1255 = vst [vmem:[%s1252 + $0x10] sm:$0xff] %v1239
      %1256 = vst [vmem:[%s1252 + $0x18] sm:$0x1] %v1244
      %s1257 = scalar_lea.vmem %s1, 128
      %v1258 = vld [vmem:[%s1257] sm:$0xff]
      %v1259 = vld [vmem:[%s1257 + $0x8] sm:$0xff]
      %v1260 = vld [vmem:[%s1257 + $0x10] sm:$0xff]
      %v1261 = vld [vmem:[%s1257 + $0x18] sm:$0x1]
      %v1262 = vld [vmem:[%s1257 + $0x20] sm:$0xff]
      %v1263 = vld [vmem:[%s1257 + $0x28] sm:$0xff]
      %v1264 = vld [vmem:[%s1257 + $0x30] sm:$0xff]
      %v1265 = vld [vmem:[%s1257 + $0x38] sm:$0x1]
      %s1266 = scalar_lea.vmem %s2, 512
      %v1267 = vld [vmem:[%s1266] sm:$0xff]
      %v1268 = vld [vmem:[%s1266 + $0x8] sm:$0xff]
      %v1269 = vld [vmem:[%s1266 + $0x10] sm:$0xff]
      %v1270 = vld [vmem:[%s1266 + $0x18] sm:$0xff]
      %v1271 = vld [vmem:[%s1266 + $0x20] sm:$0xff]
      %v1272 = vld [vmem:[%s1266 + $0x28] sm:$0xff]
      %v1273 = vld [vmem:[%s1266 + $0x30] sm:$0xff]
      %v1274 = vld [vmem:[%s1266 + $0x38] sm:$0xff]
      %v1275 = vld [vmem:[%s1266 + $0x40] sm:$0xff]
      %v1276 = vld [vmem:[%s1266 + $0x48] sm:$0xff]
      %v1277 = vld [vmem:[%s1266 + $0x50] sm:$0xff]
      %v1278 = vld [vmem:[%s1266 + $0x58] sm:$0xff]
      %v1279 = vld [vmem:[%s1266 + $0x60] sm:$0xff]
      %v1280 = vld [vmem:[%s1266 + $0x68] sm:$0xff]
      %v1281 = vld [vmem:[%s1266 + $0x70] sm:$0xff]
      %v1282 = vld [vmem:[%s1266 + $0x78] sm:$0xff]
      %v1283 = vld [vmem:[%s1266 + $0x80] sm:$0xff]
      %v1284 = vld [vmem:[%s1266 + $0x88] sm:$0xff]
      %v1285 = vld [vmem:[%s1266 + $0x90] sm:$0xff]
      %v1286 = vld [vmem:[%s1266 + $0x98] sm:$0xff]
      %v1287 = vld [vmem:[%s1266 + $0xa0] sm:$0xff]
      %v1288 = vld [vmem:[%s1266 + $0xa8] sm:$0xff]
      %v1289 = vld [vmem:[%s1266 + $0xb0] sm:$0xff]
      %v1290 = vld [vmem:[%s1266 + $0xb8] sm:$0xff]
      %v1291 = vld [vmem:[%s1266 + $0xc0] sm:$0xff]
      %v1292 = vld [vmem:[%s1266 + $0xc8] sm:$0xff]
      %v1293 = vld [vmem:[%s1266 + $0xd0] sm:$0xff]
      %v1294 = vld [vmem:[%s1266 + $0xd8] sm:$0xff]
      %v1295 = vld [vmem:[%s1266 + $0xe0] sm:$0xff]
      %v1296 = vld [vmem:[%s1266 + $0xe8] sm:$0xff]
      %v1297 = vld [vmem:[%s1266 + $0xf0] sm:$0xff]
      %v1298 = vld [vmem:[%s1266 + $0xf8] sm:$0xff]
      %v1300 = vsel %vm227, %v1258, 0
      %v1303 = vsel %vm227, %v1259, 0
      %v1306 = vsel %vm227, %v1260, 0
      %v1309 = vsel %vm227, %v1261, 0
      %1311 = vmatprep.subr.mxu0 0.0
      %1312 = vmatpush1.msra.mxu0 0.0
      %1313 = vmatprep.subr.mxu0 0.0
      %1314 = vmatpush1.msra.mxu0 0.0
      %1315 = vmatprep.subr.mxu0 0.0
      %1316 = vmatpush1.msra.mxu0 0.0
      %1317 = vmatprep.subr.mxu0 0.0
      %1318 = vmatpush1.msra.mxu0 0.0
      %1319 = vmatprep.subr.mxu0 0.0
      %1320 = vmatpush1.msra.mxu0 0.0
      %1321 = vmatprep.subr.mxu0 0.0
      %1322 = vmatpush1.msra.mxu0 0.0
      %1323 = vmatprep.subr.mxu0 0.0
      %1324 = vmatpush1.msra.mxu0 0.0
      %1325 = vmatprep.subr.mxu0 0.0
      %1326 = vmatpush1.msra.mxu0 0.0
      %1327 = vmatprep.subr.mxu0 0.0
      %1328 = vmatpush1.msra.mxu0 0.0
      %1329 = vmatprep.subr.mxu0 0.0
      %1330 = vmatpush1.msra.mxu0 0.0
      %1331 = vmatprep.subr.mxu0 0.0
      %1332 = vmatpush1.msra.mxu0 0.0
      %1333 = vmatprep.subr.mxu0 0.0
      %1334 = vmatpush1.msra.mxu0 0.0
      %1335 = vmatprep.subr.mxu0 0.0
      %1336 = vmatpush1.msra.mxu0 %v182
      %1337 = vmatprep.subr.mxu0 0.0
      %1338 = vmatpush1.msra.mxu0 %v181
      %1339 = vmatprep.subr.mxu0 0.0
      %1340 = vmatpush1.msra.mxu0 %v180
      %1341 = vmatprep.subr.mxu0 0.0
      %1342 = vmatpush1.msra.mxu0 %v179
      %1343 = vmatprep.subr.mxu0 0.0
      %1344 = vmatpush2.msra.mxu0 0.0
      %1345 = vmatprep.subr.mxu0 0.0
      %1346 = vmatpush2.msra.mxu0 0.0
      %1347 = vmatprep.subr.mxu0 0.0
      %1348 = vmatpush2.msra.mxu0 0.0
      %1349 = vmatprep.subr.mxu0 0.0
      %1350 = vmatpush2.msra.mxu0 0.0
      %1351 = vmatprep.subr.mxu0 0.0
      %1352 = vmatpush2.msra.mxu0 0.0
      %1353 = vmatprep.subr.mxu0 0.0
      %1354 = vmatpush2.msra.mxu0 0.0
      %1355 = vmatprep.subr.mxu0 0.0
      %1356 = vmatpush2.msra.mxu0 0.0
      %1357 = vmatprep.subr.mxu0 0.0
      %1358 = vmatpush2.msra.mxu0 0.0
      %1359 = vmatprep.subr.mxu0 0.0
      %1360 = vmatpush2.msra.mxu0 0.0
      %1361 = vmatprep.subr.mxu0 0.0
      %1362 = vmatpush2.msra.mxu0 0.0
      %1363 = vmatprep.subr.mxu0 0.0
      %1364 = vmatpush2.msra.mxu0 0.0
      %1365 = vmatprep.subr.mxu0 0.0
      %1366 = vmatpush2.msra.mxu0 0.0
      %1367 = vmatprep.subr.mxu0 0.0
      %1368 = vmatpush2.msra.mxu0 0.0
      %1369 = vmatprep.subr.mxu0 0.0
      %1370 = vmatpush2.msra.mxu0 0.0
      %1371 = vmatprep.subr.mxu0 0.0
      %1372 = vmatpush2.msra.mxu0 0.0
      %1373 = vmatprep.subr.mxu0 0.0
      %1374 = vmatpush2.msra.mxu0 0.0
      %1375 = vmatprep.mubr.f32.mxu0 0.0
      %1376 = vmatmul.mubr.f32.gmra.mxu0 %v1300
      %v1377 = vpop.f32.mrf.mxu0
      %v1378 = vadd.f32 0.0, %v1377
      %v1379 = vpop.f32.mrf.mxu0
      %1380 = vmatprep.mubr.f32.mxu0 0.0
      %1381 = vmatmul.mubr.f32.gmra.mxu0 %v1303
      %v1382 = vpop.f32.mrf.mxu0
      %v1383 = vadd.f32 0.0, %v1382
      %v1384 = vpop.f32.mrf.mxu0
      %1385 = vmatprep.mubr.f32.mxu0 0.0
      %1386 = vmatmul.mubr.f32.gmra.mxu0 %v1306
      %v1387 = vpop.f32.mrf.mxu0
      %v1388 = vadd.f32 0.0, %v1387
      %v1389 = vpop.f32.mrf.mxu0
      %1390 = vmatprep.mubr.f32.mxu0 0.0
      %1391 = vmatmul.mubr.f32.gmra.mxu0 %v1309
      %v1392 = vpop.f32.mrf.mxu0
      %v1393 = vadd.f32 0.0, %v1392
      %v1394 = vpop.f32.mrf.mxu0
      %1395 = vdwg.mxu0
      %v1397 = vsel %vm227, %v1262, 0
      %v1400 = vsel %vm227, %v1263, 0
      %v1403 = vsel %vm227, %v1264, 0
      %v1406 = vsel %vm227, %v1265, 0
      %1408 = vmatprep.subr.mxu0 0.0
      %1409 = vmatpush1.msra.mxu0 0.0
      %1410 = vmatprep.subr.mxu0 0.0
      %1411 = vmatpush1.msra.mxu0 0.0
      %1412 = vmatprep.subr.mxu0 0.0
      %1413 = vmatpush1.msra.mxu0 0.0
      %1414 = vmatprep.subr.mxu0 0.0
      %1415 = vmatpush1.msra.mxu0 0.0
      %1416 = vmatprep.subr.mxu0 0.0
      %1417 = vmatpush1.msra.mxu0 0.0
      %1418 = vmatprep.subr.mxu0 0.0
      %1419 = vmatpush1.msra.mxu0 0.0
      %1420 = vmatprep.subr.mxu0 0.0
      %1421 = vmatpush1.msra.mxu0 0.0
      %1422 = vmatprep.subr.mxu0 0.0
      %1423 = vmatpush1.msra.mxu0 0.0
      %1424 = vmatprep.subr.mxu0 0.0
      %1425 = vmatpush1.msra.mxu0 0.0
      %1426 = vmatprep.subr.mxu0 0.0
      %1427 = vmatpush1.msra.mxu0 0.0
      %1428 = vmatprep.subr.mxu0 0.0
      %1429 = vmatpush1.msra.mxu0 0.0
      %1430 = vmatprep.subr.mxu0 0.0
      %1431 = vmatpush1.msra.mxu0 0.0
      %1432 = vmatprep.subr.mxu0 0.0
      %1433 = vmatpush1.msra.mxu0 %v186
      %1434 = vmatprep.subr.mxu0 0.0
      %1435 = vmatpush1.msra.mxu0 %v185
      %1436 = vmatprep.subr.mxu0 0.0
      %1437 = vmatpush1.msra.mxu0 %v184
      %1438 = vmatprep.subr.mxu0 0.0
      %1439 = vmatpush1.msra.mxu0 %v183
      %1440 = vmatprep.subr.mxu0 0.0
      %1441 = vmatpush2.msra.mxu0 0.0
      %1442 = vmatprep.subr.mxu0 0.0
      %1443 = vmatpush2.msra.mxu0 0.0
      %1444 = vmatprep.subr.mxu0 0.0
      %1445 = vmatpush2.msra.mxu0 0.0
      %1446 = vmatprep.subr.mxu0 0.0
      %1447 = vmatpush2.msra.mxu0 0.0
      %1448 = vmatprep.subr.mxu0 0.0
      %1449 = vmatpush2.msra.mxu0 0.0
      %1450 = vmatprep.subr.mxu0 0.0
      %1451 = vmatpush2.msra.mxu0 0.0
      %1452 = vmatprep.subr.mxu0 0.0
      %1453 = vmatpush2.msra.mxu0 0.0
      %1454 = vmatprep.subr.mxu0 0.0
      %1455 = vmatpush2.msra.mxu0 0.0
      %1456 = vmatprep.subr.mxu0 0.0
      %1457 = vmatpush2.msra.mxu0 0.0
      %1458 = vmatprep.subr.mxu0 0.0
      %1459 = vmatpush2.msra.mxu0 0.0
      %1460 = vmatprep.subr.mxu0 0.0
      %1461 = vmatpush2.msra.mxu0 0.0
      %1462 = vmatprep.subr.mxu0 0.0
      %1463 = vmatpush2.msra.mxu0 0.0
      %1464 = vmatprep.subr.mxu0 0.0
      %1465 = vmatpush2.msra.mxu0 0.0
      %1466 = vmatprep.subr.mxu0 0.0
      %1467 = vmatpush2.msra.mxu0 0.0
      %1468 = vmatprep.subr.mxu0 0.0
      %1469 = vmatpush2.msra.mxu0 0.0
      %1470 = vmatprep.subr.mxu0 0.0
      %1471 = vmatpush2.msra.mxu0 0.0
      %1472 = vmatprep.mubr.f32.mxu0 0.0
      %1473 = vmatmul.mubr.f32.gmra.mxu0 %v1397
      %v1474 = vpop.f32.mrf.mxu0
      %v1475 = vadd.f32 0.0, %v1474
      %v1476 = vpop.f32.mrf.mxu0
      %1477 = vmatprep.mubr.f32.mxu0 0.0
      %1478 = vmatmul.mubr.f32.gmra.mxu0 %v1400
      %v1479 = vpop.f32.mrf.mxu0
      %v1480 = vadd.f32 0.0, %v1479
      %v1481 = vpop.f32.mrf.mxu0
      %1482 = vmatprep.mubr.f32.mxu0 0.0
      %1483 = vmatmul.mubr.f32.gmra.mxu0 %v1403
      %v1484 = vpop.f32.mrf.mxu0
      %v1485 = vadd.f32 0.0, %v1484
      %v1486 = vpop.f32.mrf.mxu0
      %1487 = vmatprep.mubr.f32.mxu0 0.0
      %1488 = vmatmul.mubr.f32.gmra.mxu0 %v1406
      %v1489 = vpop.f32.mrf.mxu0
      %v1490 = vadd.f32 0.0, %v1489
      %v1491 = vpop.f32.mrf.mxu0
      %1492 = vdwg.mxu0
      %v1494 = vsel %vm227, %v1378, 0
      %v1497 = vsel %vm227, %v1383, 0
      %v1500 = vsel %vm227, %v1388, 0
      %v1503 = vsel %vm227, %v1393, 0
      %v1506 = vsel %vm227, %v1267, 0
      %v1509 = vsel %vm227, %v1268, 0
      %v1512 = vsel %vm227, %v1269, 0
      %v1515 = vsel %vm227, %v1270, 0
      %v1518 = vsel %vm227, %v1271, 0
      %v1521 = vsel %vm227, %v1272, 0
      %v1524 = vsel %vm227, %v1273, 0
      %v1527 = vsel %vm227, %v1274, 0
      %v1530 = vsel %vm227, %v1275, 0
      %v1533 = vsel %vm227, %v1276, 0
      %v1536 = vsel %vm227, %v1277, 0
      %v1539 = vsel %vm227, %v1278, 0
      %v1542 = vsel %vm227, %v1279, 0
      %v1545 = vsel %vm227, %v1280, 0
      %v1548 = vsel %vm227, %v1281, 0
      %v1551 = vsel %vm227, %v1282, 0
      %1553 = vmatprep.subr.mxu0 0.0
      %1554 = vmatpush1.xpose.msra.mxu0 %v1551
      %1555 = vmatprep.subr.mxu0 0.0
      %1556 = vmatpush1.xpose.msra.mxu0 %v1548
      %1557 = vmatprep.subr.mxu0 0.0
      %1558 = vmatpush1.xpose.msra.mxu0 %v1545
      %1559 = vmatprep.subr.mxu0 0.0
      %1560 = vmatpush1.xpose.msra.mxu0 %v1542
      %1561 = vmatprep.subr.mxu0 0.0
      %1562 = vmatpush1.xpose.msra.mxu0 %v1539
      %1563 = vmatprep.subr.mxu0 0.0
      %1564 = vmatpush1.xpose.msra.mxu0 %v1536
      %1565 = vmatprep.subr.mxu0 0.0
      %1566 = vmatpush1.xpose.msra.mxu0 %v1533
      %1567 = vmatprep.subr.mxu0 0.0
      %1568 = vmatpush1.xpose.msra.mxu0 %v1530
      %1569 = vmatprep.subr.mxu0 0.0
      %1570 = vmatpush1.xpose.msra.mxu0 %v1527
      %1571 = vmatprep.subr.mxu0 0.0
      %1572 = vmatpush1.xpose.msra.mxu0 %v1524
      %1573 = vmatprep.subr.mxu0 0.0
      %1574 = vmatpush1.xpose.msra.mxu0 %v1521
      %1575 = vmatprep.subr.mxu0 0.0
      %1576 = vmatpush1.xpose.msra.mxu0 %v1518
      %1577 = vmatprep.subr.mxu0 0.0
      %1578 = vmatpush1.xpose.msra.mxu0 %v1515
      %1579 = vmatprep.subr.mxu0 0.0
      %1580 = vmatpush1.xpose.msra.mxu0 %v1512
      %1581 = vmatprep.subr.mxu0 0.0
      %1582 = vmatpush1.xpose.msra.mxu0 %v1509
      %1583 = vmatprep.subr.mxu0 0.0
      %1584 = vmatpush1.xpose.msra.mxu0 %v1506
      %1585 = vmatprep.subr.mxu0 0.0
      %1586 = vmatpush2.xpose.msra.mxu0 0.0
      %1587 = vmatprep.subr.mxu0 0.0
      %1588 = vmatpush2.xpose.msra.mxu0 0.0
      %1589 = vmatprep.subr.mxu0 0.0
      %1590 = vmatpush2.xpose.msra.mxu0 0.0
      %1591 = vmatprep.subr.mxu0 0.0
      %1592 = vmatpush2.xpose.msra.mxu0 0.0
      %1593 = vmatprep.subr.mxu0 0.0
      %1594 = vmatpush2.xpose.msra.mxu0 0.0
      %1595 = vmatprep.subr.mxu0 0.0
      %1596 = vmatpush2.xpose.msra.mxu0 0.0
      %1597 = vmatprep.subr.mxu0 0.0
      %1598 = vmatpush2.xpose.msra.mxu0 0.0
      %1599 = vmatprep.subr.mxu0 0.0
      %1600 = vmatpush2.xpose.msra.mxu0 0.0
      %1601 = vmatprep.subr.mxu0 0.0
      %1602 = vmatpush2.xpose.msra.mxu0 0.0
      %1603 = vmatprep.subr.mxu0 0.0
      %1604 = vmatpush2.xpose.msra.mxu0 0.0
      %1605 = vmatprep.subr.mxu0 0.0
      %1606 = vmatpush2.xpose.msra.mxu0 0.0
      %1607 = vmatprep.subr.mxu0 0.0
      %1608 = vmatpush2.xpose.msra.mxu0 0.0
      %1609 = vmatprep.subr.mxu0 0.0
      %1610 = vmatpush2.xpose.msra.mxu0 0.0
      %1611 = vmatprep.subr.mxu0 0.0
      %1612 = vmatpush2.xpose.msra.mxu0 0.0
      %1613 = vmatprep.subr.mxu0 0.0
      %1614 = vmatpush2.xpose.msra.mxu0 0.0
      %1615 = vmatprep.subr.mxu0 0.0
      %1616 = vmatpush2.xpose.msra.mxu0 0.0
      %1617 = vmatprep.mubr.f32.mxu0 0.0
      %1618 = vmatmul.mubr.f32.gmra.mxu0 %v1494
      %v1619 = vpop.f32.mrf.mxu0
      %v1620 = vadd.f32 0.0, %v1619
      %v1621 = vpop.f32.mrf.mxu0
      %1622 = vmatprep.mubr.f32.mxu0 0.0
      %1623 = vmatmul.mubr.f32.gmra.mxu0 %v1497
      %v1624 = vpop.f32.mrf.mxu0
      %v1625 = vadd.f32 0.0, %v1624
      %v1626 = vpop.f32.mrf.mxu0
      %1627 = vmatprep.mubr.f32.mxu0 0.0
      %1628 = vmatmul.mubr.f32.gmra.mxu0 %v1500
      %v1629 = vpop.f32.mrf.mxu0
      %v1630 = vadd.f32 0.0, %v1629
      %v1631 = vpop.f32.mrf.mxu0
      %1632 = vmatprep.mubr.f32.mxu0 0.0
      %1633 = vmatmul.mubr.f32.gmra.mxu0 %v1503
      %v1634 = vpop.f32.mrf.mxu0
      %v1635 = vadd.f32 0.0, %v1634
      %v1636 = vpop.f32.mrf.mxu0
      %1637 = vdwg.mxu0
      %v1639 = vsel %vm227, %v1475, 0
      %v1642 = vsel %vm227, %v1480, 0
      %v1645 = vsel %vm227, %v1485, 0
      %v1648 = vsel %vm227, %v1490, 0
      %v1651 = vsel %vm227, %v1283, 0
      %v1654 = vsel %vm227, %v1284, 0
      %v1657 = vsel %vm227, %v1285, 0
      %v1660 = vsel %vm227, %v1286, 0
      %v1663 = vsel %vm227, %v1287, 0
      %v1666 = vsel %vm227, %v1288, 0
      %v1669 = vsel %vm227, %v1289, 0
      %v1672 = vsel %vm227, %v1290, 0
      %v1675 = vsel %vm227, %v1291, 0
      %v1678 = vsel %vm227, %v1292, 0
      %v1681 = vsel %vm227, %v1293, 0
      %v1684 = vsel %vm227, %v1294, 0
      %v1687 = vsel %vm227, %v1295, 0
      %v1690 = vsel %vm227, %v1296, 0
      %v1693 = vsel %vm227, %v1297, 0
      %v1696 = vsel %vm227, %v1298, 0
      %1698 = vmatprep.subr.mxu0 0.0
      %1699 = vmatpush1.xpose.msra.mxu0 %v1696
      %1700 = vmatprep.subr.mxu0 0.0
      %1701 = vmatpush1.xpose.msra.mxu0 %v1693
      %1702 = vmatprep.subr.mxu0 0.0
      %1703 = vmatpush1.xpose.msra.mxu0 %v1690
      %1704 = vmatprep.subr.mxu0 0.0
      %1705 = vmatpush1.xpose.msra.mxu0 %v1687
      %1706 = vmatprep.subr.mxu0 0.0
      %1707 = vmatpush1.xpose.msra.mxu0 %v1684
      %1708 = vmatprep.subr.mxu0 0.0
      %1709 = vmatpush1.xpose.msra.mxu0 %v1681
      %1710 = vmatprep.subr.mxu0 0.0
      %1711 = vmatpush1.xpose.msra.mxu0 %v1678
      %1712 = vmatprep.subr.mxu0 0.0
      %1713 = vmatpush1.xpose.msra.mxu0 %v1675
      %1714 = vmatprep.subr.mxu0 0.0
      %1715 = vmatpush1.xpose.msra.mxu0 %v1672
      %1716 = vmatprep.subr.mxu0 0.0
      %1717 = vmatpush1.xpose.msra.mxu0 %v1669
      %1718 = vmatprep.subr.mxu0 0.0
      %1719 = vmatpush1.xpose.msra.mxu0 %v1666
      %1720 = vmatprep.subr.mxu0 0.0
      %1721 = vmatpush1.xpose.msra.mxu0 %v1663
      %1722 = vmatprep.subr.mxu0 0.0
      %1723 = vmatpush1.xpose.msra.mxu0 %v1660
      %1724 = vmatprep.subr.mxu0 0.0
      %1725 = vmatpush1.xpose.msra.mxu0 %v1657
      %1726 = vmatprep.subr.mxu0 0.0
      %1727 = vmatpush1.xpose.msra.mxu0 %v1654
      %1728 = vmatprep.subr.mxu0 0.0
      %1729 = vmatpush1.xpose.msra.mxu0 %v1651
      %1730 = vmatprep.subr.mxu0 0.0
      %1731 = vmatpush2.xpose.msra.mxu0 0.0
      %1732 = vmatprep.subr.mxu0 0.0
      %1733 = vmatpush2.xpose.msra.mxu0 0.0
      %1734 = vmatprep.subr.mxu0 0.0
      %1735 = vmatpush2.xpose.msra.mxu0 0.0
      %1736 = vmatprep.subr.mxu0 0.0
      %1737 = vmatpush2.xpose.msra.mxu0 0.0
      %1738 = vmatprep.subr.mxu0 0.0
      %1739 = vmatpush2.xpose.msra.mxu0 0.0
      %1740 = vmatprep.subr.mxu0 0.0
      %1741 = vmatpush2.xpose.msra.mxu0 0.0
      %1742 = vmatprep.subr.mxu0 0.0
      %1743 = vmatpush2.xpose.msra.mxu0 0.0
      %1744 = vmatprep.subr.mxu0 0.0
      %1745 = vmatpush2.xpose.msra.mxu0 0.0
      %1746 = vmatprep.subr.mxu0 0.0
      %1747 = vmatpush2.xpose.msra.mxu0 0.0
      %1748 = vmatprep.subr.mxu0 0.0
      %1749 = vmatpush2.xpose.msra.mxu0 0.0
      %1750 = vmatprep.subr.mxu0 0.0
      %1751 = vmatpush2.xpose.msra.mxu0 0.0
      %1752 = vmatprep.subr.mxu0 0.0
      %1753 = vmatpush2.xpose.msra.mxu0 0.0
      %1754 = vmatprep.subr.mxu0 0.0
      %1755 = vmatpush2.xpose.msra.mxu0 0.0
      %1756 = vmatprep.subr.mxu0 0.0
      %1757 = vmatpush2.xpose.msra.mxu0 0.0
      %1758 = vmatprep.subr.mxu0 0.0
      %1759 = vmatpush2.xpose.msra.mxu0 0.0
      %1760 = vmatprep.subr.mxu0 0.0
      %1761 = vmatpush2.xpose.msra.mxu0 0.0
      %1762 = vmatprep.mubr.f32.mxu0 0.0
      %1763 = vmatmul.mubr.f32.gmra.mxu0 %v1639
      %v1764 = vpop.f32.mrf.mxu0
      %v1765 = vadd.f32 0.0, %v1764
      %v1766 = vpop.f32.mrf.mxu0
      %1767 = vmatprep.mubr.f32.mxu0 0.0
      %1768 = vmatmul.mubr.f32.gmra.mxu0 %v1642
      %v1769 = vpop.f32.mrf.mxu0
      %v1770 = vadd.f32 0.0, %v1769
      %v1771 = vpop.f32.mrf.mxu0
      %1772 = vmatprep.mubr.f32.mxu0 0.0
      %1773 = vmatmul.mubr.f32.gmra.mxu0 %v1645
      %v1774 = vpop.f32.mrf.mxu0
      %v1775 = vadd.f32 0.0, %v1774
      %v1776 = vpop.f32.mrf.mxu0
      %1777 = vmatprep.mubr.f32.mxu0 0.0
      %1778 = vmatmul.mubr.f32.gmra.mxu0 %v1648
      %v1779 = vpop.f32.mrf.mxu0
      %v1780 = vadd.f32 0.0, %v1779
      %v1781 = vpop.f32.mrf.mxu0
      %1782 = vdwg.mxu0
      %s1783 = scalar_lea.vmem %s177, 64
      %1784 = vst [vmem:[%s1783] sm:$0xff] %v1620
      %1785 = vst [vmem:[%s1783 + $0x8] sm:$0xff] %v1625
      %1786 = vst [vmem:[%s1783 + $0x10] sm:$0xff] %v1630
      %1787 = vst [vmem:[%s1783 + $0x18] sm:$0x1] %v1635
      %s1788 = scalar_lea.vmem %s177, 160
      %1789 = vst [vmem:[%s1788] sm:$0xff] %v1765
      %1790 = vst [vmem:[%s1788 + $0x8] sm:$0xff] %v1770
      %1791 = vst [vmem:[%s1788 + $0x10] sm:$0xff] %v1775
      %1792 = vst [vmem:[%s1788 + $0x18] sm:$0x1] %v1780
      %s1793 = smul.u32 2, %s14
      %p1794 = scmp.lt.s32.totalorder %s1793, 3
      %s1795 = scalar_select %p1794, %s1793, 3
      %s1796 = smul.addr %s1795, 12
      %s1797 = smul.addr %s1796, 8
      %s1798 = scalar_lea.vmem %s3, %s1797
      // Predicated region
      $region33: #{tpu_custom_call.1} parent=31 // pred_check
        %p1799 = pneg %p100
      $region34: #{tpu_custom_call.1} parent=31 // pred_check_branch
        %1801 = sbr.rel (%p1799) target = $region36
      $region35: #{tpu_custom_call.1} parent=31 // pred_region
        %s1802 = smul.u32 2, %s14
      $region36: #{tpu_custom_call.1} parent=31 // pred_fallthru
        _
    $region32: #{tpu_custom_call.1} parent=5 // pred_fallthru
      _
    %p1803 = scmp.le.s32.totalorder 2, %s9
    // Predicated region
    $region37: #{tpu_custom_call.1} parent=5 // pred_check
      %p1804 = pneg %p1803
    $region38: #{tpu_custom_call.1} parent=5 // pred_check_branch
      %1806 = sbr.rel (%p1804) target = $region40
    $region39: #{tpu_custom_call.1} parent=5 // pred_region
      %s1807 = ssub.s32 %s9, 2
      // Predicated region
      $region41: #{tpu_custom_call.1} parent=39 // pred_check
        %p1808 = pneg %p106
      $region42: #{tpu_custom_call.1} parent=39 // pred_check_branch
        %1810 = sbr.rel (%p1808) target = $region44
      $region43: #{tpu_custom_call.1} parent=39 // pred_region
        %s1811 = smul.u32 2, %s15
        %p1812 = scmp.lt.s32.totalorder %s1811, 3
        %s1813 = scalar_select %p1812, %s1811, 3
        %s1814 = smul.addr %s1813, 12
        %s1815 = smul.addr %s1814, 8
        %s1816 = scalar_lea.vmem %s3, %s1815
      $region44: #{tpu_custom_call.1} parent=39 // pred_fallthru
        _
    $region40: #{tpu_custom_call.1} parent=5 // pred_fallthru
      _
  $region6: #{tpu_custom_call.1} parent=0 // loop_footer
    %s13 = sadd.s32 1, %s9
  $region7: #{tpu_custom_call.1} parent=0 // loop_footer_branch
    %8 = sbr.rel target = $region3
  $region8: #{tpu_custom_call.1} parent=0 // loop_exit
    _

</llo_original>
